<compile_context>
chip_gen: v7x
topology: tpu7x:2x2x1
jax: 0.10.0
libtpu: 0.0.40
codegen_flags: <defaults>
</compile_context>

<pallas_src>
import functools

import jax
import jax.numpy as jnp
from jax.experimental import pallas as pl
from jax.experimental.pallas import tpu as pltpu

SELU_ALPHA = 1.6732632423543772
SELU_SCALE = 1.0507009873554805
LANE = 128


def _selu(x):
    return SELU_SCALE * jnp.where(x > 0.0, x, SELU_ALPHA * (jnp.exp(x) - 1.0))


def _round_up(v, m):
    return ((v + m - 1) // m) * m


def _tpu_defaults():
    """Generation-aware VMEM / TensorCore-count defaults."""
    kind = ""
    try:
        kind = jax.devices()[0].device_kind.lower()
    except Exception:
        pass
    if "v7" in kind or kind.startswith("tpu7"):
        # 64 MiB physical VMEM per TC, 2 TCs per chip.
        return dict(cores=2, vmem_cap=48 * 2**20, in_budget=12 * 2**20)
    if "v6" in kind:
        return dict(cores=1, vmem_cap=96 * 2**20, in_budget=24 * 2**20)
    if "v5" in kind and "lite" not in kind and "v5e" not in kind:
        # v5p-style megacore
        return dict(cores=2, vmem_cap=96 * 2**20, in_budget=24 * 2**20)
    if "v5" in kind:
        return dict(cores=1, vmem_cap=96 * 2**20, in_budget=24 * 2**20)
    return dict(cores=1, vmem_cap=64 * 2**20, in_budget=16 * 2**20)


def shapelet_kernel(x_ref, pbig_ref, band_ref, ystats_ref,
                    w1_ref, b1_ref, w2_ref, b2_ref, wo_ref, bo_ref,
                    out_ref, resT_ref, res_ref, xsq_ref,
                    *, num_bags, npp, n_protos, mrowp):
    # x_ref:    (Bblk, L)       natural-layout series block
    # pbig_ref: (L, MROWP)      column w*NPP+p = prototype p placed at window w
    # band_ref: (L, NBANDP)     column w = ones over window w
    # ystats_ref: (NPP, 2)      [:,0] = ||proto||, [:,1] = 1/max(||proto||,1e-12)
    # w1_ref: (H, 4*NPP)  b1_ref: (H,1)  w2_ref: (H,H)  b2_ref: (H,1)
    # wo_ref: (NC, H)     bo_ref: (NC,1)
    # out_ref: (NC, Bblk)       lane-dense logits (batch on lanes)
    # resT_ref: (Bblk, W) res_ref: (W, Bblk) xsq_ref: (Bblk, L)  VMEM scratch
    f32 = jnp.float32
    bblk = x_ref.shape[0]
    w_total = resT_ref.shape[1]

    xv = x_ref[...].astype(f32)
    xsq_ref[...] = xv * xv

    # Banded matmuls: every window's prototype dot-products and window energy
    # in two MXU passes (no per-window matmuls, no sublane reductions).
    resT_ref[:, :mrowp] = jnp.dot(xv, pbig_ref[...],
                                  preferred_element_type=f32)
    resT_ref[:, mrowp:] = jnp.dot(xsq_ref[...], band_ref[...],
                                  preferred_element_type=f32)

    # Relayout the (small) matmul results to batch-on-lanes with 128x128
    # chunk transposes (XLU); the big x tile itself is never transposed.
    for c in range(w_total // LANE):
        for r in range(bblk // LANE):
            res_ref[c * LANE:(c + 1) * LANE, r * LANE:(r + 1) * LANE] = (
                jnp.transpose(
                    resT_ref[r * LANE:(r + 1) * LANE, c * LANE:(c + 1) * LANE]))

    y_norm = ystats_ref[:, 0:1]          # (NPP, 1)
    inv_y = ystats_ref[:, 1:2]           # (NPP, 1)

    def window_step(w, carry):
        mn, mx, sm, cs = carry
        row0 = w * npp
        if not isinstance(row0, int):
            row0 = pl.multiple_of(row0, 8)
        dot_w = res_ref[pl.ds(row0, npp), :]              # (NPP, Bblk)
        xn2 = res_ref[pl.ds(mrowp + w, 1), :]             # (1, Bblk) window energy
        # One EUP op per window: inv = 1/max(||x||,1e-12); ||x|| = xn2*inv.
        inv_xn = jax.lax.rsqrt(jnp.maximum(xn2, 1e-24))
        xn = xn2 * inv_xn
        # torch pairwise_distances uses UNsquared norms, then clamps at 0.
        dist = jnp.maximum(xn + y_norm - 2.0 * dot_w, 0.0)
        cos = dot_w * (inv_xn * inv_y)                    # F.normalize eps=1e-12
        return (jnp.minimum(mn, dist), jnp.maximum(mx, dist),
                sm + dist, jnp.maximum(cs, cos))

    init = (jnp.full((npp, bblk), jnp.inf, f32),
            jnp.full((npp, bblk), -jnp.inf, f32),
            jnp.zeros((npp, bblk), f32),
            jnp.full((npp, bblk), -jnp.inf, f32))
    if num_bags <= 16:
        carry = init
        for w in range(num_bags):                  # small fixed NB: full unroll
            carry = window_step(w, carry)
    else:
        carry = jax.lax.fori_loop(0, num_bags, window_step, init)
    min_d, max_d, sum_d, cos_mx = carry
    mean_d = sum_d * (1.0 / num_bags)

    # Layer norm over the prototype axis (axis 0), masked to the real NP rows
    # (padded prototype rows contribute nothing and stay exactly zero).
    mask = (jax.lax.broadcasted_iota(jnp.int32, (npp, 1), 0) < n_protos
            ).astype(f32)
    inv_npro = 1.0 / n_protos

    def ln(f):
        fm = f * mask
        mu = jnp.sum(fm, axis=0, keepdims=True) * inv_npro
        d = (f - mu) * mask
        var = jnp.sum(d * d, axis=0, keepdims=True) * inv_npro
        return d * jax.lax.rsqrt(var + 1e-8)

    # features_to_use = "min,max,mean,cos"; blocks are 8-row aligned, so this
    # concatenate is layout-free (no sublane repacking).
    feats = jnp.concatenate([ln(min_d), ln(max_d), ln(mean_d), ln(cos_mx)],
                            axis=0)                       # (4*NPP, Bblk)

    # MLP head, transposed (batch on lanes).  Dropout = identity (eval forward).
    # TODO(synk): training-mode dropout (stochastic masking) is not implemented.
    h1 = _selu(jnp.dot(w1_ref[...], feats, preferred_element_type=f32)
               + b1_ref[...])
    h2 = _selu(jnp.dot(w2_ref[...], h1, preferred_element_type=f32)
               + b2_ref[...])
    out = jnp.dot(wo_ref[...], h2, preferred_element_type=f32) + bo_ref[...]
    out_ref[...] = out.astype(out_ref.dtype)


def shapelet_generation_forward(x, prototypes, w1, b1, w2, b2, wo, bo,
                                bag_size, stride_ratio, *, block_b=512,
                                x_input_dtype=None):
    """x: (B, L, 1) univariate series. Returns logits (B, n_classes)."""
    f32 = jnp.float32
    B, L, F = x.shape
    assert F == 1, "univariate time series assumed (channel squeezed into bag)"
    assert L >= bag_size
    stride = max(1, int(bag_size * stride_ratio))
    num_bags = (L - bag_size) // stride + 1
    NP, BS = prototypes.shape
    H, IN = w1.shape
    NC = wo.shape[0]
    assert BS == bag_size and IN == 4 * NP

    NPP = _round_up(NP, 8)                  # prototype rows padded to vreg rows
    MROWP = _round_up(num_bags * NPP, LANE)  # dot-product columns (lane padded)
    NBANDP = _round_up(num_bags, LANE)       # window-energy columns
    W = MROWP + NBANDP

    info = _tpu_defaults()
    x_bytes = jnp.dtype(x_input_dtype if x_input_dtype is not None
                        else x.dtype).itemsize

    # ---- generation-aware batch-block sizing -------------------------------
    block_b = max(LANE, (block_b // LANE) * LANE)
    Bblk = max(LANE, min(block_b, pl.cdiv(B, LANE) * LANE))

    def _est_vmem(bb):
        db = 2                                           # double buffering
        v = db * bb * L * x_bytes                        # x tile
        v += db * NC * bb * 4                            # output tile
        v += bb * W * 4 + W * bb * 4 + bb * L * 4        # scratches
        v += db * 4 * (L * MROWP + L * NBANDP + NPP * 2 +
                       H * 4 * NPP + H + H * H + H + NC * H + NC)
        return v

    budget = info["vmem_cap"] - (4 << 20)
    while Bblk > LANE and (_est_vmem(Bblk) > budget or
                           2 * Bblk * L * x_bytes > info["in_budget"]):
        Bblk -= LANE
    # v7x (2 TensorCores): make the parallel grid axis even so both TCs work.
    if info["cores"] == 2:
        for cand in range(Bblk, LANE - 1, -LANE):
            if pl.cdiv(B, cand) % 2 == 0:
                Bblk = cand
                break

    Bpad = pl.cdiv(B, Bblk) * Bblk
    grid_b = Bpad // Bblk

    # ---- inputs: natural layout, no wrapper-side transpose of x ------------
    x2 = x[:, :, 0]                                      # (B, L), metadata-only
    if Bpad != B:
        x2 = jnp.pad(x2, ((0, Bpad - B), (0, 0)))        # only ragged batches
    if x_input_dtype is not None:
        x2 = x2.astype(x_input_dtype)

    protos = prototypes.astype(f32)
    protos_pad = jnp.zeros((NPP, BS), f32).at[:NP].set(protos)
    pbigT = jnp.zeros((L, MROWP), f32)
    band = jnp.zeros((L, NBANDP), f32)
    for w in range(num_bags):
        s = w * stride
        pbigT = pbigT.at[s:s + BS, w * NPP:(w + 1) * NPP].set(
            jnp.transpose(protos_pad))
        band = band.at[s:s + BS, w].set(1.0)
    y_norm = jnp.sqrt(jnp.sum(protos_pad * protos_pad, axis=1, keepdims=True))
    inv_y = 1.0 / jnp.maximum(y_norm, 1e-12)
    ystats = jnp.concatenate([y_norm, inv_y], axis=1)     # (NPP, 2)

    # Embed linear1's weight into the padded feature layout (zero pad columns).
    w1p = jnp.zeros((H, 4 * NPP), f32)
    for k in range(4):
        w1p = w1p.at[:, k * NPP:k * NPP + NP].set(
            w1[:, k * NP:(k + 1) * NP].astype(f32))

    kernel = functools.partial(shapelet_kernel, num_bags=num_bags, npp=NPP,
                               n_protos=NP, mrowp=MROWP)

    out_t = pl.pallas_call(
        kernel,
        out_shape=jax.ShapeDtypeStruct((NC, Bpad), jnp.float32),
        grid_spec=pltpu.PrefetchScalarGridSpec(
            num_scalar_prefetch=0,
            grid=(grid_b,),
            in_specs=[
                pl.BlockSpec((Bblk, L), lambda b: (b, 0)),      # x (natural)
                pl.BlockSpec((L, MROWP), lambda b: (0, 0)),     # banded protos
                pl.BlockSpec((L, NBANDP), lambda b: (0, 0)),    # ones band
                pl.BlockSpec((NPP, 2), lambda b: (0, 0)),       # proto norms
                pl.BlockSpec((H, 4 * NPP), lambda b: (0, 0)),
                pl.BlockSpec((H, 1), lambda b: (0, 0)),
                pl.BlockSpec((H, H), lambda b: (0, 0)),
                pl.BlockSpec((H, 1), lambda b: (0, 0)),
                pl.BlockSpec((NC, H), lambda b: (0, 0)),
                pl.BlockSpec((NC, 1), lambda b: (0, 0)),
            ],
            out_specs=pl.BlockSpec((NC, Bblk), lambda b: (0, b)),
            scratch_shapes=[
                pltpu.VMEM((Bblk, W), jnp.float32),             # matmul results
                pltpu.VMEM((W, Bblk), jnp.float32),             # transposed
                pltpu.VMEM((Bblk, L), jnp.float32),             # x^2
            ]),
        compiler_params=pltpu.CompilerParams(
            dimension_semantics=("parallel",),
            vmem_limit_bytes=info["vmem_cap"]),
    )(x2, pbigT, band, ystats, w1p,
      b1.reshape(H, 1).astype(f32), w2.astype(f32),
      b2.reshape(H, 1).astype(f32), wo.astype(f32),
      bo.reshape(NC, 1).astype(f32))

    return jnp.transpose(out_t[:, :B])                    # (B, NC)


def _reference_forward(x, prototypes, w1, b1, w2, b2, wo, bo,
                       bag_size, stride_ratio):
    """Pure-JAX mirror of the PyTorch forward (eval mode), for validation."""
    B, L, _ = x.shape
    stride = max(1, int(bag_size * stride_ratio))
    starts = range(0, L - bag_size + 1, stride)
    bags = jnp.stack([x[:, s:s + bag_size, 0] for s in starts], axis=1)  # (B,NB,BS)
    hi = jax.lax.Precision.HIGHEST
    x_norm = jnp.linalg.norm(bags, axis=2)[:, :, None]
    y_norm = jnp.linalg.norm(prototypes, axis=1)[None, None, :]
    dot = jnp.einsum('bns,ps->bnp', bags, prototypes, precision=hi)
    dist = jnp.clip(x_norm + y_norm - 2.0 * dot, 0.0, None)
    xn = bags / jnp.maximum(x_norm, 1e-12)
    yn = prototypes / jnp.maximum(
        jnp.linalg.norm(prototypes, axis=1, keepdims=True), 1e-12)
    cos = jnp.einsum('bns,ps->bnp', xn, yn, precision=hi)

    def ln(f):
        mu = f.mean(-1, keepdims=True)
        var = ((f - mu) ** 2).mean(-1, keepdims=True)
        return (f - mu) / jnp.sqrt(var + 1e-8)

    feats = jnp.concatenate([ln(dist.min(1)), ln(dist.max(1)),
                             ln(dist.mean(1)), ln(cos.max(1))], axis=1)
    h1 = _selu(jnp.dot(feats, w1.T, precision=hi) + b1)
    h2 = _selu(jnp.dot(h1, w2.T, precision=hi) + b2)
    return jnp.dot(h2, wo.T, precision=hi) + bo


if __name__ == "__main__":
    # Small, deterministic configuration consistent with the module:
    #   n_prototypes=4, bag_size=8, n_classes=3, stride_ratio=0.5,
    #   features_to_use="min,max,mean,cos" -> input_size=16, hidden=32
    B, L, F = 2, 16, 1
    n_prototypes, bag_size, n_classes, stride_ratio = 4, 8, 3, 0.5
    input_size = 4 * n_prototypes
    hidden = int(input_size * 2.0)

    key = jax.random.PRNGKey(0)
    ks = jax.random.split(key, 8)
    x = jax.random.normal(ks[0], (B, L, F), jnp.float32)

    # deterministic synthetic parameters (shapes from __init__)
    prototypes = jax.random.normal(ks[1], (n_prototypes, bag_size), jnp.float32) * 0.01
    w1 = jax.random.normal(ks[2], (hidden, input_size), jnp.float32) * 0.1
    b1 = jax.random.normal(ks[3], (hidden,), jnp.float32) * 0.1
    w2 = jax.random.normal(ks[4], (hidden, hidden), jnp.float32) * 0.1
    b2 = jax.random.normal(ks[5], (hidden,), jnp.float32) * 0.1
    wo = jax.random.normal(ks[6], (n_classes, hidden), jnp.float32) * 0.1
    bo = jax.random.normal(ks[7], (n_classes,), jnp.float32) * 0.1

    out = shapelet_generation_forward(x, prototypes, w1, b1, w2, b2, wo, bo,
                                      bag_size, stride_ratio)
    out = jax.block_until_ready(out)
    assert out.shape == (B, n_classes), out.shape
    assert bool(jnp.all(jnp.isfinite(out)))

    ref = _reference_forward(x, prototypes, w1, b1, w2, b2, wo, bo,
                             bag_size, stride_ratio)
    assert bool(jnp.allclose(out, ref, rtol=5e-2, atol=5e-2)), (out, ref)
    print("KERNEL_OK")
</pallas_src>

<mosaic_0001>
module attributes {stable_mosaic.version = 11 : i64} {
  func.func @shapelet_kernel(%arg0: i32, %arg1: memref<128x16xf32, #tpu.memory_space<vmem>>, %arg2: memref<16x128xf32, #tpu.memory_space<vmem>>, %arg3: memref<16x128xf32, #tpu.memory_space<vmem>>, %arg4: memref<8x2xf32, #tpu.memory_space<vmem>>, %arg5: memref<32x32xf32, #tpu.memory_space<vmem>>, %arg6: memref<32x1xf32, #tpu.memory_space<vmem>>, %arg7: memref<32x32xf32, #tpu.memory_space<vmem>>, %arg8: memref<32x1xf32, #tpu.memory_space<vmem>>, %arg9: memref<3x32xf32, #tpu.memory_space<vmem>>, %arg10: memref<3x1xf32, #tpu.memory_space<vmem>>, %arg11: memref<3x128xf32, #tpu.memory_space<vmem>>, %arg12: memref<128x256xf32, #tpu.memory_space<vmem>>, %arg13: memref<256x128xf32, #tpu.memory_space<vmem>>, %arg14: memref<128x16xf32, #tpu.memory_space<vmem>>) attributes {dimension_semantics = [#tpu.dimension_semantics<parallel>], iteration_bounds = array<i64: 1>, scalar_prefetch = 0 : i64, scratch_operands = 3 : i64, tpu.core_type = #tpu.core_type<tc>, window_params = [{transform_indices = @transform_0, window_bounds = array<i64: 128, 16>}, {pipeline_mode = #tpu.pipeline_mode<synchronous>, transform_indices = @transform_1, window_bounds = array<i64: 16, 128>}, {pipeline_mode = #tpu.pipeline_mode<synchronous>, transform_indices = @transform_2, window_bounds = array<i64: 16, 128>}, {pipeline_mode = #tpu.pipeline_mode<synchronous>, transform_indices = @transform_3, window_bounds = array<i64: 8, 2>}, {pipeline_mode = #tpu.pipeline_mode<synchronous>, transform_indices = @transform_4, window_bounds = array<i64: 32, 32>}, {pipeline_mode = #tpu.pipeline_mode<synchronous>, transform_indices = @transform_5, window_bounds = array<i64: 32, 1>}, {pipeline_mode = #tpu.pipeline_mode<synchronous>, transform_indices = @transform_6, window_bounds = array<i64: 32, 32>}, {pipeline_mode = #tpu.pipeline_mode<synchronous>, transform_indices = @transform_7, window_bounds = array<i64: 32, 1>}, {pipeline_mode = #tpu.pipeline_mode<synchronous>, transform_indices = @transform_8, window_bounds = array<i64: 3, 32>}, {pipeline_mode = #tpu.pipeline_mode<synchronous>, transform_indices = @transform_9, window_bounds = array<i64: 3, 1>}, {transform_indices = @transform_10, window_bounds = array<i64: 3, 128>}]} {
    %c0 = arith.constant 0 : index
    %c0_0 = arith.constant 0 : index
    %0 = vector.load %arg1[%c0, %c0_0] : memref<128x16xf32, #tpu.memory_space<vmem>>, vector<128x16xf32>
    %1 = arith.mulf %0, %0 : vector<128x16xf32>
    %c0_1 = arith.constant 0 : index
    %c0_2 = arith.constant 0 : index
    %2 = vector.load %arg14[%c0_1, %c0_2] : memref<128x16xf32, #tpu.memory_space<vmem>>, vector<128x16xf32>
    tpu.vector_store %arg14[%c0_1, %c0_2], %1 {strides = array<i32>} : memref<128x16xf32, #tpu.memory_space<vmem>>, vector<128x16xf32>,
    %c0_3 = arith.constant 0 : index
    %c0_4 = arith.constant 0 : index
    %3 = vector.load %arg2[%c0_3, %c0_4] : memref<16x128xf32, #tpu.memory_space<vmem>>, vector<16x128xf32>
    %cst = arith.constant dense<0.000000e+00> : vector<128x128xf32>
    %4 = tpu.matmul %0, %3, %cst {dimension_numbers = #tpu.dot_dimension_numbers<[1], [0], [0], [1], [0, 0, 1, 1], [], []>} : vector<128x16xf32>, vector<16x128xf32>, vector<128x128xf32> -> vector<128x128xf32>
    %c0_5 = arith.constant 0 : index
    %c0_6 = arith.constant 0 : index
    %5 = vector.load %arg12[%c0_5, %c0_6] : memref<128x256xf32, #tpu.memory_space<vmem>>, vector<128x128xf32>
    tpu.vector_store %arg12[%c0_5, %c0_6], %4 {strides = array<i32>} : memref<128x256xf32, #tpu.memory_space<vmem>>, vector<128x128xf32>,
    %c0_7 = arith.constant 0 : index
    %c0_8 = arith.constant 0 : index
    %6 = vector.load %arg14[%c0_7, %c0_8] : memref<128x16xf32, #tpu.memory_space<vmem>>, vector<128x16xf32>
    %c0_9 = arith.constant 0 : index
    %c0_10 = arith.constant 0 : index
    %7 = vector.load %arg3[%c0_9, %c0_10] : memref<16x128xf32, #tpu.memory_space<vmem>>, vector<16x128xf32>
    %cst_11 = arith.constant dense<0.000000e+00> : vector<128x128xf32>
    %8 = tpu.matmul %6, %7, %cst_11 {dimension_numbers = #tpu.dot_dimension_numbers<[1], [0], [0], [1], [0, 0, 1, 1], [], []>} : vector<128x16xf32>, vector<16x128xf32>, vector<128x128xf32> -> vector<128x128xf32>
    %c0_12 = arith.constant 0 : index
    %c128 = arith.constant 128 : index
    %9 = vector.load %arg12[%c0_12, %c128] : memref<128x256xf32, #tpu.memory_space<vmem>>, vector<128x128xf32>
    tpu.vector_store %arg12[%c0_12, %c128], %8 {strides = array<i32>} : memref<128x256xf32, #tpu.memory_space<vmem>>, vector<128x128xf32>,
    %c0_13 = arith.constant 0 : index
    %c0_14 = arith.constant 0 : index
    %10 = vector.load %arg12[%c0_13, %c0_14] : memref<128x256xf32, #tpu.memory_space<vmem>>, vector<128x128xf32>
    %11 = tpu.transpose %10, [1, 0] : vector<128x128xf32> -> vector<128x128xf32>
    %c0_15 = arith.constant 0 : index
    %c0_16 = arith.constant 0 : index
    %12 = vector.load %arg13[%c0_15, %c0_16] : memref<256x128xf32, #tpu.memory_space<vmem>>, vector<128x128xf32>
    tpu.vector_store %arg13[%c0_15, %c0_16], %11 {strides = array<i32>} : memref<256x128xf32, #tpu.memory_space<vmem>>, vector<128x128xf32>,
    %c0_17 = arith.constant 0 : index
    %c128_18 = arith.constant 128 : index
    %13 = vector.load %arg12[%c0_17, %c128_18] : memref<128x256xf32, #tpu.memory_space<vmem>>, vector<128x128xf32>
    %14 = tpu.transpose %13, [1, 0] : vector<128x128xf32> -> vector<128x128xf32>
    %c128_19 = arith.constant 128 : index
    %c0_20 = arith.constant 0 : index
    %15 = vector.load %arg13[%c128_19, %c0_20] : memref<256x128xf32, #tpu.memory_space<vmem>>, vector<128x128xf32>
    tpu.vector_store %arg13[%c128_19, %c0_20], %14 {strides = array<i32>} : memref<256x128xf32, #tpu.memory_space<vmem>>, vector<128x128xf32>,
    %c0_21 = arith.constant 0 : index
    %c0_22 = arith.constant 0 : index
    %16 = vector.load %arg4[%c0_21, %c0_22] : memref<8x2xf32, #tpu.memory_space<vmem>>, vector<8x1xf32>
    %c0_23 = arith.constant 0 : index
    %c1 = arith.constant 1 : index
    %17 = vector.load %arg4[%c0_23, %c1] : memref<8x2xf32, #tpu.memory_space<vmem>>, vector<8x1xf32>
    %cst_24 = arith.constant 0x7F800000 : f32
    %18 = vector.broadcast %cst_24 : f32 to vector<8x128xf32>
    %cst_25 = arith.constant 0xFF800000 : f32
    %19 = vector.broadcast %cst_25 : f32 to vector<8x128xf32>
    %cst_26 = arith.constant 0.000000e+00 : f32
    %20 = vector.broadcast %cst_26 : f32 to vector<8x128xf32>
    %cst_27 = arith.constant 0xFF800000 : f32
    %21 = vector.broadcast %cst_27 : f32 to vector<8x128xf32>
    %c0_28 = arith.constant 0 : index
    %c0_29 = arith.constant 0 : index
    %22 = vector.load %arg13[%c0_28, %c0_29] : memref<256x128xf32, #tpu.memory_space<vmem>>, vector<8x128xf32>
    %c128_30 = arith.constant 128 : index
    %c0_31 = arith.constant 0 : index
    %23 = vector.load %arg13[%c128_30, %c0_31] : memref<256x128xf32, #tpu.memory_space<vmem>>, vector<1x128xf32>
    %cst_32 = arith.constant 1.000000e-24 : f32
    %24 = vector.broadcast %cst_32 : f32 to vector<1x128xf32>
    %25 = arith.maximumf %23, %24 : vector<1x128xf32>
    %26 = math.rsqrt %25 : vector<1x128xf32>
    %27 = arith.mulf %23, %26 : vector<1x128xf32>
    %28 = vector.broadcast %27 : vector<1x128xf32> to vector<8x128xf32>
    %29 = vector.broadcast %16 : vector<8x1xf32> to vector<8x128xf32>
    %30 = arith.addf %28, %29 : vector<8x128xf32>
    %cst_33 = arith.constant 2.000000e+00 : f32
    %31 = vector.broadcast %cst_33 : f32 to vector<8x128xf32>
    %32 = arith.mulf %31, %22 : vector<8x128xf32>
    %33 = arith.subf %30, %32 : vector<8x128xf32>
    %cst_34 = arith.constant 0.000000e+00 : f32
    %34 = vector.broadcast %cst_34 : f32 to vector<8x128xf32>
    %35 = arith.maximumf %33, %34 : vector<8x128xf32>
    %36 = vector.broadcast %26 : vector<1x128xf32> to vector<8x128xf32>
    %37 = vector.broadcast %17 : vector<8x1xf32> to vector<8x128xf32>
    %38 = arith.mulf %36, %37 : vector<8x128xf32>
    %39 = arith.mulf %22, %38 : vector<8x128xf32>
    %40 = arith.minimumf %18, %35 : vector<8x128xf32>
    %41 = arith.maximumf %19, %35 : vector<8x128xf32>
    %42 = arith.addf %20, %35 : vector<8x128xf32>
    %43 = arith.maximumf %21, %39 : vector<8x128xf32>
    %c8 = arith.constant 8 : index
    %c0_35 = arith.constant 0 : index
    %44 = vector.load %arg13[%c8, %c0_35] : memref<256x128xf32, #tpu.memory_space<vmem>>, vector<8x128xf32>
    %c129 = arith.constant 129 : index
    %c0_36 = arith.constant 0 : index
    %45 = vector.load %arg13[%c129, %c0_36] : memref<256x128xf32, #tpu.memory_space<vmem>>, vector<1x128xf32>
    %cst_37 = arith.constant 1.000000e-24 : f32
    %46 = vector.broadcast %cst_37 : f32 to vector<1x128xf32>
    %47 = arith.maximumf %45, %46 : vector<1x128xf32>
    %48 = math.rsqrt %47 : vector<1x128xf32>
    %49 = arith.mulf %45, %48 : vector<1x128xf32>
    %50 = vector.broadcast %49 : vector<1x128xf32> to vector<8x128xf32>
    %51 = vector.broadcast %16 : vector<8x1xf32> to vector<8x128xf32>
    %52 = arith.addf %50, %51 : vector<8x128xf32>
    %cst_38 = arith.constant 2.000000e+00 : f32
    %53 = vector.broadcast %cst_38 : f32 to vector<8x128xf32>
    %54 = arith.mulf %53, %44 : vector<8x128xf32>
    %55 = arith.subf %52, %54 : vector<8x128xf32>
    %cst_39 = arith.constant 0.000000e+00 : f32
    %56 = vector.broadcast %cst_39 : f32 to vector<8x128xf32>
    %57 = arith.maximumf %55, %56 : vector<8x128xf32>
    %58 = vector.broadcast %48 : vector<1x128xf32> to vector<8x128xf32>
    %59 = vector.broadcast %17 : vector<8x1xf32> to vector<8x128xf32>
    %60 = arith.mulf %58, %59 : vector<8x128xf32>
    %61 = arith.mulf %44, %60 : vector<8x128xf32>
    %62 = arith.minimumf %40, %57 : vector<8x128xf32>
    %63 = arith.maximumf %41, %57 : vector<8x128xf32>
    %64 = arith.addf %42, %57 : vector<8x128xf32>
    %65 = arith.maximumf %43, %61 : vector<8x128xf32>
    %c16 = arith.constant 16 : index
    %c0_40 = arith.constant 0 : index
    %66 = vector.load %arg13[%c16, %c0_40] : memref<256x128xf32, #tpu.memory_space<vmem>>, vector<8x128xf32>
    %c130 = arith.constant 130 : index
    %c0_41 = arith.constant 0 : index
    %67 = vector.load %arg13[%c130, %c0_41] : memref<256x128xf32, #tpu.memory_space<vmem>>, vector<1x128xf32>
    %cst_42 = arith.constant 1.000000e-24 : f32
    %68 = vector.broadcast %cst_42 : f32 to vector<1x128xf32>
    %69 = arith.maximumf %67, %68 : vector<1x128xf32>
    %70 = math.rsqrt %69 : vector<1x128xf32>
    %71 = arith.mulf %67, %70 : vector<1x128xf32>
    %72 = vector.broadcast %71 : vector<1x128xf32> to vector<8x128xf32>
    %73 = vector.broadcast %16 : vector<8x1xf32> to vector<8x128xf32>
    %74 = arith.addf %72, %73 : vector<8x128xf32>
    %cst_43 = arith.constant 2.000000e+00 : f32
    %75 = vector.broadcast %cst_43 : f32 to vector<8x128xf32>
    %76 = arith.mulf %75, %66 : vector<8x128xf32>
    %77 = arith.subf %74, %76 : vector<8x128xf32>
    %cst_44 = arith.constant 0.000000e+00 : f32
    %78 = vector.broadcast %cst_44 : f32 to vector<8x128xf32>
    %79 = arith.maximumf %77, %78 : vector<8x128xf32>
    %80 = vector.broadcast %70 : vector<1x128xf32> to vector<8x128xf32>
    %81 = vector.broadcast %17 : vector<8x1xf32> to vector<8x128xf32>
    %82 = arith.mulf %80, %81 : vector<8x128xf32>
    %83 = arith.mulf %66, %82 : vector<8x128xf32>
    %84 = arith.minimumf %62, %79 : vector<8x128xf32>
    %85 = arith.maximumf %63, %79 : vector<8x128xf32>
    %86 = arith.addf %64, %79 : vector<8x128xf32>
    %87 = arith.maximumf %65, %83 : vector<8x128xf32>
    %cst_45 = arith.constant 0.333333343 : f32
    %88 = vector.broadcast %cst_45 : f32 to vector<8x128xf32>
    %89 = arith.mulf %86, %88 : vector<8x128xf32>
    %90 = tpu.iota {dimensions = array<i32: 0>} : vector<8x1xi32>
    %c4_i32 = arith.constant 4 : i32
    %91 = vector.broadcast %c4_i32 : i32 to vector<8x1xi32>
    %92 = arith.cmpi slt, %90, %91 : vector<8x1xi32>
    %93 = arith.extui %92 : vector<8x1xi1> to vector<8x1xi32>
    %94 = arith.sitofp %93 : vector<8x1xi32> to vector<8x1xf32>
    %95 = vector.broadcast %94 : vector<8x1xf32> to vector<8x128xf32>
    %96 = arith.mulf %84, %95 : vector<8x128xf32>
    %cst_46 = arith.constant dense<0.000000e+00> : vector<128xf32>
    %97 = vector.multi_reduction <add>, %96, %cst_46 [0] : vector<8x128xf32> to vector<128xf32>
    %98 = vector.shape_cast %97 : vector<128xf32> to vector<1x128xf32>
    %cst_47 = arith.constant 2.500000e-01 : f32
    %99 = vector.broadcast %cst_47 : f32 to vector<1x128xf32>
    %100 = arith.mulf %98, %99 : vector<1x128xf32>
    %101 = vector.broadcast %100 : vector<1x128xf32> to vector<8x128xf32>
    %102 = arith.subf %84, %101 : vector<8x128xf32>
    %103 = vector.broadcast %94 : vector<8x1xf32> to vector<8x128xf32>
    %104 = arith.mulf %102, %103 : vector<8x128xf32>
    %105 = arith.mulf %104, %104 : vector<8x128xf32>
    %cst_48 = arith.constant dense<0.000000e+00> : vector<128xf32>
    %106 = vector.multi_reduction <add>, %105, %cst_48 [0] : vector<8x128xf32> to vector<128xf32>
    %107 = vector.shape_cast %106 : vector<128xf32> to vector<1x128xf32>
    %cst_49 = arith.constant 2.500000e-01 : f32
    %108 = vector.broadcast %cst_49 : f32 to vector<1x128xf32>
    %109 = arith.mulf %107, %108 : vector<1x128xf32>
    %cst_50 = arith.constant 9.99999993E-9 : f32
    %110 = vector.broadcast %cst_50 : f32 to vector<1x128xf32>
    %111 = arith.addf %109, %110 : vector<1x128xf32>
    %112 = math.rsqrt %111 : vector<1x128xf32>
    %113 = vector.broadcast %112 : vector<1x128xf32> to vector<8x128xf32>
    %114 = arith.mulf %104, %113 : vector<8x128xf32>
    %115 = vector.broadcast %94 : vector<8x1xf32> to vector<8x128xf32>
    %116 = arith.mulf %85, %115 : vector<8x128xf32>
    %cst_51 = arith.constant dense<0.000000e+00> : vector<128xf32>
    %117 = vector.multi_reduction <add>, %116, %cst_51 [0] : vector<8x128xf32> to vector<128xf32>
    %118 = vector.shape_cast %117 : vector<128xf32> to vector<1x128xf32>
    %cst_52 = arith.constant 2.500000e-01 : f32
    %119 = vector.broadcast %cst_52 : f32 to vector<1x128xf32>
    %120 = arith.mulf %118, %119 : vector<1x128xf32>
    %121 = vector.broadcast %120 : vector<1x128xf32> to vector<8x128xf32>
    %122 = arith.subf %85, %121 : vector<8x128xf32>
    %123 = vector.broadcast %94 : vector<8x1xf32> to vector<8x128xf32>
    %124 = arith.mulf %122, %123 : vector<8x128xf32>
    %125 = arith.mulf %124, %124 : vector<8x128xf32>
    %cst_53 = arith.constant dense<0.000000e+00> : vector<128xf32>
    %126 = vector.multi_reduction <add>, %125, %cst_53 [0] : vector<8x128xf32> to vector<128xf32>
    %127 = vector.shape_cast %126 : vector<128xf32> to vector<1x128xf32>
    %cst_54 = arith.constant 2.500000e-01 : f32
    %128 = vector.broadcast %cst_54 : f32 to vector<1x128xf32>
    %129 = arith.mulf %127, %128 : vector<1x128xf32>
    %cst_55 = arith.constant 9.99999993E-9 : f32
    %130 = vector.broadcast %cst_55 : f32 to vector<1x128xf32>
    %131 = arith.addf %129, %130 : vector<1x128xf32>
    %132 = math.rsqrt %131 : vector<1x128xf32>
    %133 = vector.broadcast %132 : vector<1x128xf32> to vector<8x128xf32>
    %134 = arith.mulf %124, %133 : vector<8x128xf32>
    %135 = vector.broadcast %94 : vector<8x1xf32> to vector<8x128xf32>
    %136 = arith.mulf %89, %135 : vector<8x128xf32>
    %cst_56 = arith.constant dense<0.000000e+00> : vector<128xf32>
    %137 = vector.multi_reduction <add>, %136, %cst_56 [0] : vector<8x128xf32> to vector<128xf32>
    %138 = vector.shape_cast %137 : vector<128xf32> to vector<1x128xf32>
    %cst_57 = arith.constant 2.500000e-01 : f32
    %139 = vector.broadcast %cst_57 : f32 to vector<1x128xf32>
    %140 = arith.mulf %138, %139 : vector<1x128xf32>
    %141 = vector.broadcast %140 : vector<1x128xf32> to vector<8x128xf32>
    %142 = arith.subf %89, %141 : vector<8x128xf32>
    %143 = vector.broadcast %94 : vector<8x1xf32> to vector<8x128xf32>
    %144 = arith.mulf %142, %143 : vector<8x128xf32>
    %145 = arith.mulf %144, %144 : vector<8x128xf32>
    %cst_58 = arith.constant dense<0.000000e+00> : vector<128xf32>
    %146 = vector.multi_reduction <add>, %145, %cst_58 [0] : vector<8x128xf32> to vector<128xf32>
    %147 = vector.shape_cast %146 : vector<128xf32> to vector<1x128xf32>
    %cst_59 = arith.constant 2.500000e-01 : f32
    %148 = vector.broadcast %cst_59 : f32 to vector<1x128xf32>
    %149 = arith.mulf %147, %148 : vector<1x128xf32>
    %cst_60 = arith.constant 9.99999993E-9 : f32
    %150 = vector.broadcast %cst_60 : f32 to vector<1x128xf32>
    %151 = arith.addf %149, %150 : vector<1x128xf32>
    %152 = math.rsqrt %151 : vector<1x128xf32>
    %153 = vector.broadcast %152 : vector<1x128xf32> to vector<8x128xf32>
    %154 = arith.mulf %144, %153 : vector<8x128xf32>
    %155 = vector.broadcast %94 : vector<8x1xf32> to vector<8x128xf32>
    %156 = arith.mulf %87, %155 : vector<8x128xf32>
    %cst_61 = arith.constant dense<0.000000e+00> : vector<128xf32>
    %157 = vector.multi_reduction <add>, %156, %cst_61 [0] : vector<8x128xf32> to vector<128xf32>
    %158 = vector.shape_cast %157 : vector<128xf32> to vector<1x128xf32>
    %cst_62 = arith.constant 2.500000e-01 : f32
    %159 = vector.broadcast %cst_62 : f32 to vector<1x128xf32>
    %160 = arith.mulf %158, %159 : vector<1x128xf32>
    %161 = vector.broadcast %160 : vector<1x128xf32> to vector<8x128xf32>
    %162 = arith.subf %87, %161 : vector<8x128xf32>
    %163 = vector.broadcast %94 : vector<8x1xf32> to vector<8x128xf32>
    %164 = arith.mulf %162, %163 : vector<8x128xf32>
    %165 = arith.mulf %164, %164 : vector<8x128xf32>
    %cst_63 = arith.constant dense<0.000000e+00> : vector<128xf32>
    %166 = vector.multi_reduction <add>, %165, %cst_63 [0] : vector<8x128xf32> to vector<128xf32>
    %167 = vector.shape_cast %166 : vector<128xf32> to vector<1x128xf32>
    %cst_64 = arith.constant 2.500000e-01 : f32
    %168 = vector.broadcast %cst_64 : f32 to vector<1x128xf32>
    %169 = arith.mulf %167, %168 : vector<1x128xf32>
    %cst_65 = arith.constant 9.99999993E-9 : f32
    %170 = vector.broadcast %cst_65 : f32 to vector<1x128xf32>
    %171 = arith.addf %169, %170 : vector<1x128xf32>
    %172 = math.rsqrt %171 : vector<1x128xf32>
    %173 = vector.broadcast %172 : vector<1x128xf32> to vector<8x128xf32>
    %174 = arith.mulf %164, %173 : vector<8x128xf32>
    %175 = tpu.concatenate %114, %134, %154, %174 in 0 : vector<8x128xf32>, vector<8x128xf32>, vector<8x128xf32>, vector<8x128xf32> -> vector<32x128xf32>
    %c0_66 = arith.constant 0 : index
    %c0_67 = arith.constant 0 : index
    %176 = vector.load %arg5[%c0_66, %c0_67] : memref<32x32xf32, #tpu.memory_space<vmem>>, vector<32x32xf32>
    %cst_68 = arith.constant dense<0.000000e+00> : vector<32x128xf32>
    %177 = tpu.matmul %176, %175, %cst_68 {dimension_numbers = #tpu.dot_dimension_numbers<[1], [0], [0], [1], [0, 0, 1, 1], [], []>} : vector<32x32xf32>, vector<32x128xf32>, vector<32x128xf32> -> vector<32x128xf32>
    %c0_69 = arith.constant 0 : index
    %c0_70 = arith.constant 0 : index
    %178 = vector.load %arg6[%c0_69, %c0_70] : memref<32x1xf32, #tpu.memory_space<vmem>>, vector<32x1xf32>
    %179 = vector.broadcast %178 : vector<32x1xf32> to vector<32x128xf32>
    %180 = arith.addf %177, %179 : vector<32x128xf32>
    %cst_71 = arith.constant 0.000000e+00 : f32
    %181 = vector.broadcast %cst_71 : f32 to vector<32x128xf32>
    %182 = arith.cmpf ogt, %180, %181 : vector<32x128xf32>
    %183 = math.exp %180 : vector<32x128xf32>
    %cst_72 = arith.constant 1.000000e+00 : f32
    %184 = vector.broadcast %cst_72 : f32 to vector<32x128xf32>
    %185 = arith.subf %183, %184 : vector<32x128xf32>
    %cst_73 = arith.constant 1.67326319 : f32
    %186 = vector.broadcast %cst_73 : f32 to vector<32x128xf32>
    %187 = arith.mulf %186, %185 : vector<32x128xf32>
    %188 = arith.select %182, %180, %187 : vector<32x128xi1>, vector<32x128xf32>
    %cst_74 = arith.constant 1.05070102 : f32
    %189 = vector.broadcast %cst_74 : f32 to vector<32x128xf32>
    %190 = arith.mulf %189, %188 : vector<32x128xf32>
    %c0_75 = arith.constant 0 : index
    %c0_76 = arith.constant 0 : index
    %191 = vector.load %arg7[%c0_75, %c0_76] : memref<32x32xf32, #tpu.memory_space<vmem>>, vector<32x32xf32>
    %cst_77 = arith.constant dense<0.000000e+00> : vector<32x128xf32>
    %192 = tpu.matmul %191, %190, %cst_77 {dimension_numbers = #tpu.dot_dimension_numbers<[1], [0], [0], [1], [0, 0, 1, 1], [], []>} : vector<32x32xf32>, vector<32x128xf32>, vector<32x128xf32> -> vector<32x128xf32>
    %c0_78 = arith.constant 0 : index
    %c0_79 = arith.constant 0 : index
    %193 = vector.load %arg8[%c0_78, %c0_79] : memref<32x1xf32, #tpu.memory_space<vmem>>, vector<32x1xf32>
    %194 = vector.broadcast %193 : vector<32x1xf32> to vector<32x128xf32>
    %195 = arith.addf %192, %194 : vector<32x128xf32>
    %cst_80 = arith.constant 0.000000e+00 : f32
    %196 = vector.broadcast %cst_80 : f32 to vector<32x128xf32>
    %197 = arith.cmpf ogt, %195, %196 : vector<32x128xf32>
    %198 = math.exp %195 : vector<32x128xf32>
    %cst_81 = arith.constant 1.000000e+00 : f32
    %199 = vector.broadcast %cst_81 : f32 to vector<32x128xf32>
    %200 = arith.subf %198, %199 : vector<32x128xf32>
    %cst_82 = arith.constant 1.67326319 : f32
    %201 = vector.broadcast %cst_82 : f32 to vector<32x128xf32>
    %202 = arith.mulf %201, %200 : vector<32x128xf32>
    %203 = arith.select %197, %195, %202 : vector<32x128xi1>, vector<32x128xf32>
    %cst_83 = arith.constant 1.05070102 : f32
    %204 = vector.broadcast %cst_83 : f32 to vector<32x128xf32>
    %205 = arith.mulf %204, %203 : vector<32x128xf32>
    %c0_84 = arith.constant 0 : index
    %c0_85 = arith.constant 0 : index
    %206 = vector.load %arg9[%c0_84, %c0_85] : memref<3x32xf32, #tpu.memory_space<vmem>>, vector<3x32xf32>
    %cst_86 = arith.constant dense<0.000000e+00> : vector<3x128xf32>
    %207 = tpu.matmul %206, %205, %cst_86 {dimension_numbers = #tpu.dot_dimension_numbers<[1], [0], [0], [1], [0, 0, 1, 1], [], []>} : vector<3x32xf32>, vector<32x128xf32>, vector<3x128xf32> -> vector<3x128xf32>
    %c0_87 = arith.constant 0 : index
    %c0_88 = arith.constant 0 : index
    %208 = vector.load %arg10[%c0_87, %c0_88] : memref<3x1xf32, #tpu.memory_space<vmem>>, vector<3x1xf32>
    %209 = vector.broadcast %208 : vector<3x1xf32> to vector<3x128xf32>
    %210 = arith.addf %207, %209 : vector<3x128xf32>
    %c0_89 = arith.constant 0 : index
    %c0_90 = arith.constant 0 : index
    %211 = vector.load %arg11[%c0_89, %c0_90] : memref<3x128xf32, #tpu.memory_space<vmem>>, vector<3x128xf32>
    tpu.vector_store %arg11[%c0_89, %c0_90], %210 {strides = array<i32>} : memref<3x128xf32, #tpu.memory_space<vmem>>, vector<3x128xf32>,
    return
  }
  func.func @transform_0(%arg0: i32) -> (i32, i32) {
    %c0_i32 = arith.constant 0 : i32
    %c0_i32_0 = arith.constant 0 : i32
    return %arg0, %c0_i32 : i32, i32
  }
  func.func @transform_1(%arg0: i32) -> (i32, i32) {
    %c0_i32 = arith.constant 0 : i32
    %c0_i32_0 = arith.constant 0 : i32
    %c0_i32_1 = arith.constant 0 : i32
    return %c0_i32, %c0_i32_0 : i32, i32
  }
  func.func @transform_2(%arg0: i32) -> (i32, i32) {
    %c0_i32 = arith.constant 0 : i32
    %c0_i32_0 = arith.constant 0 : i32
    %c0_i32_1 = arith.constant 0 : i32
    return %c0_i32, %c0_i32_0 : i32, i32
  }
  func.func @transform_3(%arg0: i32) -> (i32, i32) {
    %c0_i32 = arith.constant 0 : i32
    %c0_i32_0 = arith.constant 0 : i32
    %c0_i32_1 = arith.constant 0 : i32
    return %c0_i32, %c0_i32_0 : i32, i32
  }
  func.func @transform_4(%arg0: i32) -> (i32, i32) {
    %c0_i32 = arith.constant 0 : i32
    %c0_i32_0 = arith.constant 0 : i32
    %c0_i32_1 = arith.constant 0 : i32
    return %c0_i32, %c0_i32_0 : i32, i32
  }
  func.func @transform_5(%arg0: i32) -> (i32, i32) {
    %c0_i32 = arith.constant 0 : i32
    %c0_i32_0 = arith.constant 0 : i32
    %c0_i32_1 = arith.constant 0 : i32
    return %c0_i32, %c0_i32_0 : i32, i32
  }
  func.func @transform_6(%arg0: i32) -> (i32, i32) {
    %c0_i32 = arith.constant 0 : i32
    %c0_i32_0 = arith.constant 0 : i32
    %c0_i32_1 = arith.constant 0 : i32
    return %c0_i32, %c0_i32_0 : i32, i32
  }
  func.func @transform_7(%arg0: i32) -> (i32, i32) {
    %c0_i32 = arith.constant 0 : i32
    %c0_i32_0 = arith.constant 0 : i32
    %c0_i32_1 = arith.constant 0 : i32
    return %c0_i32, %c0_i32_0 : i32, i32
  }
  func.func @transform_8(%arg0: i32) -> (i32, i32) {
    %c0_i32 = arith.constant 0 : i32
    %c0_i32_0 = arith.constant 0 : i32
    %c0_i32_1 = arith.constant 0 : i32
    return %c0_i32, %c0_i32_0 : i32, i32
  }
  func.func @transform_9(%arg0: i32) -> (i32, i32) {
    %c0_i32 = arith.constant 0 : i32
    %c0_i32_0 = arith.constant 0 : i32
    %c0_i32_1 = arith.constant 0 : i32
    return %c0_i32, %c0_i32_0 : i32, i32
  }
  func.func @transform_10(%arg0: i32) -> (i32, i32) {
    %c0_i32 = arith.constant 0 : i32
    %c0_i32_0 = arith.constant 0 : i32
    return %c0_i32, %arg0 : i32, i32
  }
}

</mosaic_0001>

<llo_original>
// kernel: tpu_custom_call.1
$region0: #{tpu_custom_call.1}
  #allocation0 [shape = 'u32[]', space=smem, size = 0x4, offset = 0x4, fixed_abs, tag = 'smem constant byte address 0x4 - core index']
  #allocation1 [shape = 'u32[144,128]{1,0:T(1,128)}', space=vmem, size = 0x12000, scoped, tag = 'internal scratch']
  #allocation2 [shape = 'f32[128,256]{1,0:T(8,128)}', space=vmem, size = 0x20000, scoped, tag = 'scratch operand']
  #allocation3 [shape = 'f32[256,128]{1,0:T(8,128)}', space=vmem, size = 0x20000, scoped, tag = 'scratch operand']
  #allocation4 [shape = 'f32[128,16]{1,0:T(8,128)}', space=vmem, size = 0x10000, scoped, tag = 'scratch operand']
  %s0 = inlined_call_operand.hbm [shape: f32[128,16], index: 0, kind: input, shape index: {}]
  %s1 = inlined_call_operand.hbm [shape: f32[16,128], index: 1, kind: input, shape index: {}]
  %s2 = inlined_call_operand.hbm [shape: f32[16,128], index: 2, kind: input, shape index: {}]
  %s3 = inlined_call_operand.hbm [shape: f32[8,2], index: 3, kind: input, shape index: {}]
  %s4 = inlined_call_operand.hbm [shape: f32[32,32], index: 4, kind: input, shape index: {}]
  %s5 = inlined_call_operand.hbm [shape: f32[32,1], index: 5, kind: input, shape index: {}]
  %s6 = inlined_call_operand.hbm [shape: f32[32,32], index: 6, kind: input, shape index: {}]
  %s7 = inlined_call_operand.hbm [shape: f32[32,1], index: 7, kind: input, shape index: {}]
  %s8 = inlined_call_operand.hbm [shape: f32[3,32], index: 8, kind: input, shape index: {}]
  %s9 = inlined_call_operand.hbm [shape: f32[3,1], index: 9, kind: input, shape index: {}]
  %s10 = inlined_call_operand.hbm [shape: f32[3,128], index: 10, kind: output, shape index: {}]
  %s11 = sld [smem:[#allocation0]]
  $region90: #{tpu_custom_call.1} parent=0
    _
  %s13 = ssub.s32 1, %s11
  %s14 = scalar_select 0, %s13, %s11
  $region1: #{tpu_custom_call.1} parent=0
    #allocation5 [shape = 'u8[65536]{0}', space=vmem, size = 0x10000, scoped, tag = 'input window, operand 0, single buffered']
    #allocation6 [shape = 's32[1]{0}', space=sflag, size = 0x4, scoped, tag = 'scoped memory for tpu_custom_call.1']
    #allocation7 [shape = 's32[1]{0}', space=sflag, size = 0x4, scoped, tag = 'scoped memory for tpu_custom_call.1']
    #allocation8 [shape = 'u8[8192]{0}', space=vmem, size = 0x2000, scoped, tag = 'input window, operand 1, single buffered']
    #allocation9 [shape = 's32[1]{0}', space=sflag, size = 0x4, scoped, tag = 'scoped memory for tpu_custom_call.1']
    #allocation10 [shape = 'u8[8192]{0}', space=vmem, size = 0x2000, scoped, tag = 'input window, operand 2, single buffered']
    #allocation11 [shape = 'u8[4096]{0}', space=vmem, size = 0x1000, scoped, tag = 'input window, operand 3, single buffered']
    #allocation12 [shape = 's32[1]{0}', space=sflag, size = 0x4, scoped, tag = 'scoped memory for tpu_custom_call.1']
    #allocation13 [shape = 'u8[16384]{0}', space=vmem, size = 0x4000, scoped, tag = 'input window, operand 4, single buffered']
    #allocation14 [shape = 'u8[16384]{0}', space=vmem, size = 0x4000, scoped, tag = 'input window, operand 5, single buffered']
    #allocation15 [shape = 's32[1]{0}', space=sflag, size = 0x4, scoped, tag = 'scoped memory for tpu_custom_call.1']
    #allocation16 [shape = 'u8[16384]{0}', space=vmem, size = 0x4000, scoped, tag = 'input window, operand 6, single buffered']
    #allocation17 [shape = 'u8[16384]{0}', space=vmem, size = 0x4000, scoped, tag = 'input window, operand 7, single buffered']
    #allocation18 [shape = 's32[1]{0}', space=sflag, size = 0x4, scoped, tag = 'scoped memory for tpu_custom_call.1']
    #allocation19 [shape = 'u8[2048]{0}', space=vmem, size = 0x800, scoped, tag = 'input window, operand 8, single buffered']
    #allocation20 [shape = 'u8[2048]{0}', space=vmem, size = 0x800, scoped, tag = 'input window, operand 9, single buffered']
    #allocation21 [shape = 's32[1]{0}', space=sflag, size = 0x4, scoped, tag = 'scoped memory for tpu_custom_call.1']
    #allocation22 [shape = 'u8[2048]{0}', space=vmem, size = 0x800, scoped, tag = 'output window, operand 0, single buffered']
    %15 = vsyncpa [#allocation6], 0
    %16 = vsyncpa [#allocation9], 0
    %17 = vsyncpa [#allocation12], 0
    %18 = vsyncpa [#allocation15], 0
    %19 = vsyncpa [#allocation18], 0
    %20 = vsyncpa [#allocation21], 0
    %21 = vsyncpa [#allocation7], 0
    // Predicated region
    $region2: #{tpu_custom_call.1} parent=1 // pred_check
      _
    $region3: #{tpu_custom_call.1} parent=1 // pred_check_branch
      %23 = sbr.rel (0) target = $region5
    $region4: #{tpu_custom_call.1} parent=1 // pred_region
      %s25 = ssub.s32 2048, 2048
      %26 = vsyncadd [#allocation6], %s25
      %s27 = sshll.u32 [#allocation5], 4
      %s28 = int_to_ptr.vmem [resolvable:$true] %s27
      %33 = dma.hbm_to_vmem [thread:$0]  %s0, 2048, %s28, [#allocation6], 128, 128, 8
    $region5: #{tpu_custom_call.1} parent=1 // pred_fallthru
      _
    // Predicated region
    $region6: #{tpu_custom_call.1} parent=1 // pred_check
      _
    $region7: #{tpu_custom_call.1} parent=1 // pred_check_branch
      %35 = sbr.rel (0) target = $region9
    $region8: #{tpu_custom_call.1} parent=1 // pred_region
      %s37 = ssub.s32 256, 256
      %38 = vsyncadd [#allocation9], %s37
      %s39 = sshll.u32 [#allocation8], 4
      %s40 = int_to_ptr.vmem [resolvable:$true] %s39
      %45 = dma.hbm_to_vmem [thread:$0]  %s1, 256, %s40, [#allocation9], 128, 128, 8
    $region9: #{tpu_custom_call.1} parent=1 // pred_fallthru
      _
    // Predicated region
    $region10: #{tpu_custom_call.1} parent=1 // pred_check
      _
    $region11: #{tpu_custom_call.1} parent=1 // pred_check_branch
      %47 = sbr.rel (0) target = $region13
    $region12: #{tpu_custom_call.1} parent=1 // pred_region
      %s49 = ssub.s32 256, 256
      %50 = vsyncadd [#allocation9], %s49
      %s51 = sshll.u32 [#allocation10], 4
      %s52 = int_to_ptr.vmem [resolvable:$true] %s51
      %57 = dma.hbm_to_vmem [thread:$0]  %s2, 256, %s52, [#allocation9], 128, 128, 8
    $region13: #{tpu_custom_call.1} parent=1 // pred_fallthru
      _
    // Predicated region
    $region14: #{tpu_custom_call.1} parent=1 // pred_check
      _
    $region15: #{tpu_custom_call.1} parent=1 // pred_check_branch
      %59 = sbr.rel (0) target = $region17
    $region16: #{tpu_custom_call.1} parent=1 // pred_region
      %s61 = ssub.s32 128, 128
      %62 = vsyncadd [#allocation12], %s61
      %s64 = sshll.u32 [#allocation11], 4
      %s65 = int_to_ptr.vmem [resolvable:$true] %s64
      %67 = dma.hbm_to_vmem [thread:$0]  %s3, 128, %s65, [#allocation12]
    $region17: #{tpu_custom_call.1} parent=1 // pred_fallthru
      _
    // Predicated region
    $region18: #{tpu_custom_call.1} parent=1 // pred_check
      _
    $region19: #{tpu_custom_call.1} parent=1 // pred_check_branch
      %69 = sbr.rel (0) target = $region21
    $region20: #{tpu_custom_call.1} parent=1 // pred_region
      %s71 = ssub.s32 512, 512
      %72 = vsyncadd [#allocation12], %s71
      %s73 = sshll.u32 [#allocation13], 4
      %s74 = int_to_ptr.vmem [resolvable:$true] %s73
      %79 = dma.hbm_to_vmem [thread:$0]  %s4, 512, %s74, [#allocation12], 128, 128, 8
    $region21: #{tpu_custom_call.1} parent=1 // pred_fallthru
      _
    // Predicated region
    $region22: #{tpu_custom_call.1} parent=1 // pred_check
      _
    $region23: #{tpu_custom_call.1} parent=1 // pred_check_branch
      %81 = sbr.rel (0) target = $region25
    $region24: #{tpu_custom_call.1} parent=1 // pred_region
      %s83 = ssub.s32 512, 512
      %84 = vsyncadd [#allocation15], %s83
      %s85 = sshll.u32 [#allocation14], 4
      %s86 = int_to_ptr.vmem [resolvable:$true] %s85
      %91 = dma.hbm_to_vmem [thread:$0]  %s5, 512, %s86, [#allocation15], 128, 128, 8
    $region25: #{tpu_custom_call.1} parent=1 // pred_fallthru
      _
    // Predicated region
    $region26: #{tpu_custom_call.1} parent=1 // pred_check
      _
    $region27: #{tpu_custom_call.1} parent=1 // pred_check_branch
      %93 = sbr.rel (0) target = $region29
    $region28: #{tpu_custom_call.1} parent=1 // pred_region
      %s95 = ssub.s32 512, 512
      %96 = vsyncadd [#allocation15], %s95
      %s97 = sshll.u32 [#allocation16], 4
      %s98 = int_to_ptr.vmem [resolvable:$true] %s97
      %103 = dma.hbm_to_vmem [thread:$0]  %s6, 512, %s98, [#allocation15], 128, 128, 8
    $region29: #{tpu_custom_call.1} parent=1 // pred_fallthru
      _
    // Predicated region
    $region30: #{tpu_custom_call.1} parent=1 // pred_check
      _
    $region31: #{tpu_custom_call.1} parent=1 // pred_check_branch
      %105 = sbr.rel (0) target = $region33
    $region32: #{tpu_custom_call.1} parent=1 // pred_region
      %s107 = ssub.s32 512, 512
      %108 = vsyncadd [#allocation18], %s107
      %s109 = sshll.u32 [#allocation17], 4
      %s110 = int_to_ptr.vmem [resolvable:$true] %s109
      %115 = dma.hbm_to_vmem [thread:$0]  %s7, 512, %s110, [#allocation18], 128, 128, 8
    $region33: #{tpu_custom_call.1} parent=1 // pred_fallthru
      _
    // Predicated region
    $region34: #{tpu_custom_call.1} parent=1 // pred_check
      _
    $region35: #{tpu_custom_call.1} parent=1 // pred_check_branch
      %117 = sbr.rel (0) target = $region37
    $region36: #{tpu_custom_call.1} parent=1 // pred_region
      %s119 = ssub.s32 64, 64
      %120 = vsyncadd [#allocation18], %s119
      %s122 = sshll.u32 [#allocation19], 4
      %s123 = int_to_ptr.vmem [resolvable:$true] %s122
      %125 = dma.hbm_to_vmem [thread:$0]  %s8, 64, %s123, [#allocation18]
    $region37: #{tpu_custom_call.1} parent=1 // pred_fallthru
      _
    // Predicated region
    $region38: #{tpu_custom_call.1} parent=1 // pred_check
      _
    $region39: #{tpu_custom_call.1} parent=1 // pred_check_branch
      %127 = sbr.rel (0) target = $region41
    $region40: #{tpu_custom_call.1} parent=1 // pred_region
      %s129 = ssub.s32 64, 64
      %130 = vsyncadd [#allocation21], %s129
      %s132 = sshll.u32 [#allocation20], 4
      %s133 = int_to_ptr.vmem [resolvable:$true] %s132
      %135 = dma.hbm_to_vmem [thread:$0]  %s9, 64, %s133, [#allocation21]
    $region41: #{tpu_custom_call.1} parent=1 // pred_fallthru
      _
    // Predicated region
    $region42: #{tpu_custom_call.1} parent=1 // pred_check
      _
    $region43: #{tpu_custom_call.1} parent=1 // pred_check_branch
      %137 = sbr.rel (0) target = $region45
    $region44: #{tpu_custom_call.1} parent=1 // pred_region
      %138 = dma.done [#allocation6], 2048
    $region45: #{tpu_custom_call.1} parent=1 // pred_fallthru
      _
    // Predicated region
    $region46: #{tpu_custom_call.1} parent=1 // pred_check
      _
    $region47: #{tpu_custom_call.1} parent=1 // pred_check_branch
      %140 = sbr.rel (0) target = $region49
    $region48: #{tpu_custom_call.1} parent=1 // pred_region
      %141 = dma.done [#allocation9], 256
    $region49: #{tpu_custom_call.1} parent=1 // pred_fallthru
      _
    // Predicated region
    $region50: #{tpu_custom_call.1} parent=1 // pred_check
      _
    $region51: #{tpu_custom_call.1} parent=1 // pred_check_branch
      %143 = sbr.rel (0) target = $region53
    $region52: #{tpu_custom_call.1} parent=1 // pred_region
      %144 = dma.done [#allocation9], 256
    $region53: #{tpu_custom_call.1} parent=1 // pred_fallthru
      _
    // Predicated region
    $region54: #{tpu_custom_call.1} parent=1 // pred_check
      _
    $region55: #{tpu_custom_call.1} parent=1 // pred_check_branch
      %146 = sbr.rel (0) target = $region57
    $region56: #{tpu_custom_call.1} parent=1 // pred_region
      %147 = dma.done [#allocation12], 128
    $region57: #{tpu_custom_call.1} parent=1 // pred_fallthru
      _
    // Predicated region
    $region58: #{tpu_custom_call.1} parent=1 // pred_check
      _
    $region59: #{tpu_custom_call.1} parent=1 // pred_check_branch
      %149 = sbr.rel (0) target = $region61
    $region60: #{tpu_custom_call.1} parent=1 // pred_region
      %150 = dma.done [#allocation12], 512
    $region61: #{tpu_custom_call.1} parent=1 // pred_fallthru
      _
    // Predicated region
    $region62: #{tpu_custom_call.1} parent=1 // pred_check
      _
    $region63: #{tpu_custom_call.1} parent=1 // pred_check_branch
      %152 = sbr.rel (0) target = $region65
    $region64: #{tpu_custom_call.1} parent=1 // pred_region
      %153 = dma.done [#allocation15], 512
    $region65: #{tpu_custom_call.1} parent=1 // pred_fallthru
      _
    // Predicated region
    $region66: #{tpu_custom_call.1} parent=1 // pred_check
      _
    $region67: #{tpu_custom_call.1} parent=1 // pred_check_branch
      %155 = sbr.rel (0) target = $region69
    $region68: #{tpu_custom_call.1} parent=1 // pred_region
      %156 = dma.done [#allocation15], 512
    $region69: #{tpu_custom_call.1} parent=1 // pred_fallthru
      _
    // Predicated region
    $region70: #{tpu_custom_call.1} parent=1 // pred_check
      _
    $region71: #{tpu_custom_call.1} parent=1 // pred_check_branch
      %158 = sbr.rel (0) target = $region73
    $region72: #{tpu_custom_call.1} parent=1 // pred_region
      %159 = dma.done [#allocation18], 512
    $region73: #{tpu_custom_call.1} parent=1 // pred_fallthru
      _
    // Predicated region
    $region74: #{tpu_custom_call.1} parent=1 // pred_check
      _
    $region75: #{tpu_custom_call.1} parent=1 // pred_check_branch
      %161 = sbr.rel (0) target = $region77
    $region76: #{tpu_custom_call.1} parent=1 // pred_region
      %162 = dma.done [#allocation18], 64
    $region77: #{tpu_custom_call.1} parent=1 // pred_fallthru
      _
    // Predicated region
    $region78: #{tpu_custom_call.1} parent=1 // pred_check
      _
    $region79: #{tpu_custom_call.1} parent=1 // pred_check_branch
      %164 = sbr.rel (0) target = $region81
    $region80: #{tpu_custom_call.1} parent=1 // pred_region
      %165 = dma.done [#allocation21], 64
    $region81: #{tpu_custom_call.1} parent=1 // pred_fallthru
      _
    %v166 = vld [vmem:[#allocation5] sm:$0xff]
    %v167 = vld [vmem:[#allocation5 + $0x8] sm:$0xff]
    %v168 = vld [vmem:[#allocation5 + $0x10] sm:$0xff]
    %v169 = vld [vmem:[#allocation5 + $0x18] sm:$0xff]
    %v170 = vld [vmem:[#allocation5 + $0x20] sm:$0xff]
    %v171 = vld [vmem:[#allocation5 + $0x28] sm:$0xff]
    %v172 = vld [vmem:[#allocation5 + $0x30] sm:$0xff]
    %v173 = vld [vmem:[#allocation5 + $0x38] sm:$0xff]
    %v174 = vld [vmem:[#allocation5 + $0x40] sm:$0xff]
    %v175 = vld [vmem:[#allocation5 + $0x48] sm:$0xff]
    %v176 = vld [vmem:[#allocation5 + $0x50] sm:$0xff]
    %v177 = vld [vmem:[#allocation5 + $0x58] sm:$0xff]
    %v178 = vld [vmem:[#allocation5 + $0x60] sm:$0xff]
    %v179 = vld [vmem:[#allocation5 + $0x68] sm:$0xff]
    %v180 = vld [vmem:[#allocation5 + $0x70] sm:$0xff]
    %v181 = vld [vmem:[#allocation5 + $0x78] sm:$0xff]
    %v182 = vmul.f32 %v166, %v166
    %v183 = vmul.f32 %v167, %v167
    %v184 = vmul.f32 %v168, %v168
    %v185 = vmul.f32 %v169, %v169
    %v186 = vmul.f32 %v170, %v170
    %v187 = vmul.f32 %v171, %v171
    %v188 = vmul.f32 %v172, %v172
    %v189 = vmul.f32 %v173, %v173
    %v190 = vmul.f32 %v174, %v174
    %v191 = vmul.f32 %v175, %v175
    %v192 = vmul.f32 %v176, %v176
    %v193 = vmul.f32 %v177, %v177
    %v194 = vmul.f32 %v178, %v178
    %v195 = vmul.f32 %v179, %v179
    %v196 = vmul.f32 %v180, %v180
    %v197 = vmul.f32 %v181, %v181
    %vm198 = vcmask 130048
    %199 = vst.msk [vmem:[#allocation4] sm:$0xff] %vm198, %v182
    %200 = vst.msk [vmem:[#allocation4 + $0x8] sm:$0xff] %vm198, %v183
    %201 = vst.msk [vmem:[#allocation4 + $0x10] sm:$0xff] %vm198, %v184
    %202 = vst.msk [vmem:[#allocation4 + $0x18] sm:$0xff] %vm198, %v185
    %203 = vst.msk [vmem:[#allocation4 + $0x20] sm:$0xff] %vm198, %v186
    %204 = vst.msk [vmem:[#allocation4 + $0x28] sm:$0xff] %vm198, %v187
    %205 = vst.msk [vmem:[#allocation4 + $0x30] sm:$0xff] %vm198, %v188
    %206 = vst.msk [vmem:[#allocation4 + $0x38] sm:$0xff] %vm198, %v189
    %207 = vst.msk [vmem:[#allocation4 + $0x40] sm:$0xff] %vm198, %v190
    %208 = vst.msk [vmem:[#allocation4 + $0x48] sm:$0xff] %vm198, %v191
    %209 = vst.msk [vmem:[#allocation4 + $0x50] sm:$0xff] %vm198, %v192
    %210 = vst.msk [vmem:[#allocation4 + $0x58] sm:$0xff] %vm198, %v193
    %211 = vst.msk [vmem:[#allocation4 + $0x60] sm:$0xff] %vm198, %v194
    %212 = vst.msk [vmem:[#allocation4 + $0x68] sm:$0xff] %vm198, %v195
    %213 = vst.msk [vmem:[#allocation4 + $0x70] sm:$0xff] %vm198, %v196
    %214 = vst.msk [vmem:[#allocation4 + $0x78] sm:$0xff] %vm198, %v197
    %v215 = vld [vmem:[#allocation8] sm:$0xff]
    %v216 = vld [vmem:[#allocation8 + $0x8] sm:$0xff]
    %v218 = vsel %vm198, %v166, 0
    %v221 = vsel %vm198, %v167, 0
    %v224 = vsel %vm198, %v168, 0
    %v227 = vsel %vm198, %v169, 0
    %v230 = vsel %vm198, %v170, 0
    %v233 = vsel %vm198, %v171, 0
    %v236 = vsel %vm198, %v172, 0
    %v239 = vsel %vm198, %v173, 0
    %v242 = vsel %vm198, %v174, 0
    %v245 = vsel %vm198, %v175, 0
    %v248 = vsel %vm198, %v176, 0
    %v251 = vsel %vm198, %v177, 0
    %v254 = vsel %vm198, %v178, 0
    %v257 = vsel %vm198, %v179, 0
    %v260 = vsel %vm198, %v180, 0
    %v263 = vsel %vm198, %v181, 0
    %265 = vmatprep.subr.mxu0 0.0
    %266 = vmatpush1.msra.mxu0 %v215
    %267 = vmatprep.subr.mxu0 0.0
    %268 = vmatpush1.msra.mxu0 %v216
    %269 = vmatprep.subr.mxu0 0.0
    %270 = vmatpush1.msra.mxu0 0.0
    %271 = vmatprep.subr.mxu0 0.0
    %272 = vmatpush1.msra.mxu0 0.0
    %273 = vmatprep.subr.mxu0 0.0
    %274 = vmatpush1.msra.mxu0 0.0
    %275 = vmatprep.subr.mxu0 0.0
    %276 = vmatpush1.msra.mxu0 0.0
    %277 = vmatprep.subr.mxu0 0.0
    %278 = vmatpush1.msra.mxu0 0.0
    %279 = vmatprep.subr.mxu0 0.0
    %280 = vmatpush1.msra.mxu0 0.0
    %281 = vmatprep.subr.mxu0 0.0
    %282 = vmatpush1.msra.mxu0 0.0
    %283 = vmatprep.subr.mxu0 0.0
    %284 = vmatpush1.msra.mxu0 0.0
    %285 = vmatprep.subr.mxu0 0.0
    %286 = vmatpush1.msra.mxu0 0.0
    %287 = vmatprep.subr.mxu0 0.0
    %288 = vmatpush1.msra.mxu0 0.0
    %289 = vmatprep.subr.mxu0 0.0
    %290 = vmatpush1.msra.mxu0 0.0
    %291 = vmatprep.subr.mxu0 0.0
    %292 = vmatpush1.msra.mxu0 0.0
    %293 = vmatprep.subr.mxu0 0.0
    %294 = vmatpush1.msra.mxu0 0.0
    %295 = vmatprep.subr.mxu0 0.0
    %296 = vmatpush1.msra.mxu0 0.0
    %297 = vmatprep.subr.mxu0 0.0
    %298 = vmatpush1.msra.mxu0 0.0
    %299 = vmatprep.subr.mxu0 0.0
    %300 = vmatpush1.msra.mxu0 0.0
    %301 = vmatprep.subr.mxu0 0.0
    %302 = vmatpush1.msra.mxu0 0.0
    %303 = vmatprep.subr.mxu0 0.0
    %304 = vmatpush1.msra.mxu0 0.0
    %305 = vmatprep.subr.mxu0 0.0
    %306 = vmatpush1.msra.mxu0 0.0
    %307 = vmatprep.subr.mxu0 0.0
    %308 = vmatpush1.msra.mxu0 0.0
    %309 = vmatprep.subr.mxu0 0.0
    %310 = vmatpush1.msra.mxu0 0.0
    %311 = vmatprep.subr.mxu0 0.0
    %312 = vmatpush1.msra.mxu0 0.0
    %313 = vmatprep.subr.mxu0 0.0
    %314 = vmatpush1.msra.mxu0 0.0
    %315 = vmatprep.subr.mxu0 0.0
    %316 = vmatpush1.msra.mxu0 0.0
    %317 = vmatprep.subr.mxu0 0.0
    %318 = vmatpush1.msra.mxu0 0.0
    %319 = vmatprep.subr.mxu0 0.0
    %320 = vmatpush1.msra.mxu0 0.0
    %321 = vmatprep.subr.mxu0 0.0
    %322 = vmatpush1.msra.mxu0 0.0
    %323 = vmatprep.subr.mxu0 0.0
    %324 = vmatpush1.msra.mxu0 0.0
    %325 = vmatprep.subr.mxu0 0.0
    %326 = vmatpush1.msra.mxu0 0.0
    %327 = vmatprep.subr.mxu0 0.0
    %328 = vmatpush1.msra.mxu0 0.0
    %329 = vmatprep.mubr.f32.mxu0 0.0
    %330 = vmatmul.mubr.f32.gmra.mrb[0].mxu0 %v218
    %v331 = vpop.f32.mrb[0].mxu0
    %v332 = vadd.f32 0.0, %v331
    %v333 = vpop.f32.mrb[0].mxu0
    %334 = vmatprep.mubr.f32.mxu0 0.0
    %335 = vmatmul.mubr.f32.gmra.mrb[0].mxu0 %v221
    %v336 = vpop.f32.mrb[0].mxu0
    %v337 = vadd.f32 0.0, %v336
    %v338 = vpop.f32.mrb[0].mxu0
    %339 = vmatprep.mubr.f32.mxu0 0.0
    %340 = vmatmul.mubr.f32.gmra.mrb[0].mxu0 %v224
    %v341 = vpop.f32.mrb[0].mxu0
    %v342 = vadd.f32 0.0, %v341
    %v343 = vpop.f32.mrb[0].mxu0
    %344 = vmatprep.mubr.f32.mxu0 0.0
    %345 = vmatmul.mubr.f32.gmra.mrb[0].mxu0 %v227
    %v346 = vpop.f32.mrb[0].mxu0
    %v347 = vadd.f32 0.0, %v346
    %v348 = vpop.f32.mrb[0].mxu0
    %349 = vmatprep.mubr.f32.mxu0 0.0
    %350 = vmatmul.mubr.f32.gmra.mrb[0].mxu0 %v230
    %v351 = vpop.f32.mrb[0].mxu0
    %v352 = vadd.f32 0.0, %v351
    %v353 = vpop.f32.mrb[0].mxu0
    %354 = vmatprep.mubr.f32.mxu0 0.0
    %355 = vmatmul.mubr.f32.gmra.mrb[0].mxu0 %v233
    %v356 = vpop.f32.mrb[0].mxu0
    %v357 = vadd.f32 0.0, %v356
    %v358 = vpop.f32.mrb[0].mxu0
    %359 = vmatprep.mubr.f32.mxu0 0.0
    %360 = vmatmul.mubr.f32.gmra.mrb[0].mxu0 %v236
    %v361 = vpop.f32.mrb[0].mxu0
    %v362 = vadd.f32 0.0, %v361
    %v363 = vpop.f32.mrb[0].mxu0
    %364 = vmatprep.mubr.f32.mxu0 0.0
    %365 = vmatmul.mubr.f32.gmra.mrb[0].mxu0 %v239
    %v366 = vpop.f32.mrb[0].mxu0
    %v367 = vadd.f32 0.0, %v366
    %v368 = vpop.f32.mrb[0].mxu0
    %369 = vmatprep.mubr.f32.mxu0 0.0
    %370 = vmatmul.mubr.f32.gmra.mrb[0].mxu0 %v242
    %v371 = vpop.f32.mrb[0].mxu0
    %v372 = vadd.f32 0.0, %v371
    %v373 = vpop.f32.mrb[0].mxu0
    %374 = vmatprep.mubr.f32.mxu0 0.0
    %375 = vmatmul.mubr.f32.gmra.mrb[0].mxu0 %v245
    %v376 = vpop.f32.mrb[0].mxu0
    %v377 = vadd.f32 0.0, %v376
    %v378 = vpop.f32.mrb[0].mxu0
    %379 = vmatprep.mubr.f32.mxu0 0.0
    %380 = vmatmul.mubr.f32.gmra.mrb[0].mxu0 %v248
    %v381 = vpop.f32.mrb[0].mxu0
    %v382 = vadd.f32 0.0, %v381
    %v383 = vpop.f32.mrb[0].mxu0
    %384 = vmatprep.mubr.f32.mxu0 0.0
    %385 = vmatmul.mubr.f32.gmra.mrb[0].mxu0 %v251
    %v386 = vpop.f32.mrb[0].mxu0
    %v387 = vadd.f32 0.0, %v386
    %v388 = vpop.f32.mrb[0].mxu0
    %389 = vmatprep.mubr.f32.mxu0 0.0
    %390 = vmatmul.mubr.f32.gmra.mrb[0].mxu0 %v254
    %v391 = vpop.f32.mrb[0].mxu0
    %v392 = vadd.f32 0.0, %v391
    %v393 = vpop.f32.mrb[0].mxu0
    %394 = vmatprep.mubr.f32.mxu0 0.0
    %395 = vmatmul.mubr.f32.gmra.mrb[0].mxu0 %v257
    %v396 = vpop.f32.mrb[0].mxu0
    %v397 = vadd.f32 0.0, %v396
    %v398 = vpop.f32.mrb[0].mxu0
    %399 = vmatprep.mubr.f32.mxu0 0.0
    %400 = vmatmul.mubr.f32.gmra.mrb[0].mxu0 %v260
    %v401 = vpop.f32.mrb[0].mxu0
    %v402 = vadd.f32 0.0, %v401
    %v403 = vpop.f32.mrb[0].mxu0
    %404 = vmatprep.mubr.f32.mxu0 0.0
    %405 = vmatmul.mubr.f32.gmra.mrb[0].mxu0 %v263
    %v406 = vpop.f32.mrb[0].mxu0
    %v407 = vadd.f32 0.0, %v406
    %v408 = vpop.f32.mrb[0].mxu0
    %409 = vdwg.mxu0
    %410 = vst [vmem:[#allocation2] sm:$0xff] %v332
    %411 = vst [vmem:[#allocation2 + $0x10] sm:$0xff] %v337
    %412 = vst [vmem:[#allocation2 + $0x20] sm:$0xff] %v342
    %413 = vst [vmem:[#allocation2 + $0x30] sm:$0xff] %v347
    %414 = vst [vmem:[#allocation2 + $0x40] sm:$0xff] %v352
    %415 = vst [vmem:[#allocation2 + $0x50] sm:$0xff] %v357
    %416 = vst [vmem:[#allocation2 + $0x60] sm:$0xff] %v362
    %417 = vst [vmem:[#allocation2 + $0x70] sm:$0xff] %v367
    %418 = vst [vmem:[#allocation2 + $0x80] sm:$0xff] %v372
    %419 = vst [vmem:[#allocation2 + $0x90] sm:$0xff] %v377
    %420 = vst [vmem:[#allocation2 + $0xa0] sm:$0xff] %v382
    %421 = vst [vmem:[#allocation2 + $0xb0] sm:$0xff] %v387
    %422 = vst [vmem:[#allocation2 + $0xc0] sm:$0xff] %v392
    %423 = vst [vmem:[#allocation2 + $0xd0] sm:$0xff] %v397
    %424 = vst [vmem:[#allocation2 + $0xe0] sm:$0xff] %v402
    %425 = vst [vmem:[#allocation2 + $0xf0] sm:$0xff] %v407
    %v426 = vld [vmem:[#allocation4] sm:$0xff]
    %v427 = vld [vmem:[#allocation4 + $0x8] sm:$0xff]
    %v428 = vld [vmem:[#allocation4 + $0x10] sm:$0xff]
    %v429 = vld [vmem:[#allocation4 + $0x18] sm:$0xff]
    %v430 = vld [vmem:[#allocation4 + $0x20] sm:$0xff]
    %v431 = vld [vmem:[#allocation4 + $0x28] sm:$0xff]
    %v432 = vld [vmem:[#allocation4 + $0x30] sm:$0xff]
    %v433 = vld [vmem:[#allocation4 + $0x38] sm:$0xff]
    %v434 = vld [vmem:[#allocation4 + $0x40] sm:$0xff]
    %v435 = vld [vmem:[#allocation4 + $0x48] sm:$0xff]
    %v436 = vld [vmem:[#allocation4 + $0x50] sm:$0xff]
    %v437 = vld [vmem:[#allocation4 + $0x58] sm:$0xff]
    %v438 = vld [vmem:[#allocation4 + $0x60] sm:$0xff]
    %v439 = vld [vmem:[#allocation4 + $0x68] sm:$0xff]
    %v440 = vld [vmem:[#allocation4 + $0x70] sm:$0xff]
    %v441 = vld [vmem:[#allocation4 + $0x78] sm:$0xff]
    %v442 = vld [vmem:[#allocation10] sm:$0xff]
    %v443 = vld [vmem:[#allocation10 + $0x8] sm:$0xff]
    %v445 = vsel %vm198, %v426, 0
    %v448 = vsel %vm198, %v427, 0
    %v451 = vsel %vm198, %v428, 0
    %v454 = vsel %vm198, %v429, 0
    %v457 = vsel %vm198, %v430, 0
    %v460 = vsel %vm198, %v431, 0
    %v463 = vsel %vm198, %v432, 0
    %v466 = vsel %vm198, %v433, 0
    %v469 = vsel %vm198, %v434, 0
    %v472 = vsel %vm198, %v435, 0
    %v475 = vsel %vm198, %v436, 0
    %v478 = vsel %vm198, %v437, 0
    %v481 = vsel %vm198, %v438, 0
    %v484 = vsel %vm198, %v439, 0
    %v487 = vsel %vm198, %v440, 0
    %v490 = vsel %vm198, %v441, 0
    %492 = vmatprep.subr.mxu0 0.0
    %493 = vmatpush1.msra.mxu0 %v442
    %494 = vmatprep.subr.mxu0 0.0
    %495 = vmatpush1.msra.mxu0 %v443
    %496 = vmatprep.subr.mxu0 0.0
    %497 = vmatpush1.msra.mxu0 0.0
    %498 = vmatprep.subr.mxu0 0.0
    %499 = vmatpush1.msra.mxu0 0.0
    %500 = vmatprep.subr.mxu0 0.0
    %501 = vmatpush1.msra.mxu0 0.0
    %502 = vmatprep.subr.mxu0 0.0
    %503 = vmatpush1.msra.mxu0 0.0
    %504 = vmatprep.subr.mxu0 0.0
    %505 = vmatpush1.msra.mxu0 0.0
    %506 = vmatprep.subr.mxu0 0.0
    %507 = vmatpush1.msra.mxu0 0.0
    %508 = vmatprep.subr.mxu0 0.0
    %509 = vmatpush1.msra.mxu0 0.0
    %510 = vmatprep.subr.mxu0 0.0
    %511 = vmatpush1.msra.mxu0 0.0
    %512 = vmatprep.subr.mxu0 0.0
    %513 = vmatpush1.msra.mxu0 0.0
    %514 = vmatprep.subr.mxu0 0.0
    %515 = vmatpush1.msra.mxu0 0.0
    %516 = vmatprep.subr.mxu0 0.0
    %517 = vmatpush1.msra.mxu0 0.0
    %518 = vmatprep.subr.mxu0 0.0
    %519 = vmatpush1.msra.mxu0 0.0
    %520 = vmatprep.subr.mxu0 0.0
    %521 = vmatpush1.msra.mxu0 0.0
    %522 = vmatprep.subr.mxu0 0.0
    %523 = vmatpush1.msra.mxu0 0.0
    %524 = vmatprep.subr.mxu0 0.0
    %525 = vmatpush1.msra.mxu0 0.0
    %526 = vmatprep.subr.mxu0 0.0
    %527 = vmatpush1.msra.mxu0 0.0
    %528 = vmatprep.subr.mxu0 0.0
    %529 = vmatpush1.msra.mxu0 0.0
    %530 = vmatprep.subr.mxu0 0.0
    %531 = vmatpush1.msra.mxu0 0.0
    %532 = vmatprep.subr.mxu0 0.0
    %533 = vmatpush1.msra.mxu0 0.0
    %534 = vmatprep.subr.mxu0 0.0
    %535 = vmatpush1.msra.mxu0 0.0
    %536 = vmatprep.subr.mxu0 0.0
    %537 = vmatpush1.msra.mxu0 0.0
    %538 = vmatprep.subr.mxu0 0.0
    %539 = vmatpush1.msra.mxu0 0.0
    %540 = vmatprep.subr.mxu0 0.0
    %541 = vmatpush1.msra.mxu0 0.0
    %542 = vmatprep.subr.mxu0 0.0
    %543 = vmatpush1.msra.mxu0 0.0
    %544 = vmatprep.subr.mxu0 0.0
    %545 = vmatpush1.msra.mxu0 0.0
    %546 = vmatprep.subr.mxu0 0.0
    %547 = vmatpush1.msra.mxu0 0.0
    %548 = vmatprep.subr.mxu0 0.0
    %549 = vmatpush1.msra.mxu0 0.0
    %550 = vmatprep.subr.mxu0 0.0
    %551 = vmatpush1.msra.mxu0 0.0
    %552 = vmatprep.subr.mxu0 0.0
    %553 = vmatpush1.msra.mxu0 0.0
    %554 = vmatprep.subr.mxu0 0.0
    %555 = vmatpush1.msra.mxu0 0.0
    %556 = vmatprep.mubr.f32.mxu0 0.0
    %557 = vmatmul.mubr.f32.gmra.mrb[0].mxu0 %v445
    %v558 = vpop.f32.mrb[0].mxu0
    %v559 = vadd.f32 0.0, %v558
    %v560 = vpop.f32.mrb[0].mxu0
    %561 = vmatprep.mubr.f32.mxu0 0.0
    %562 = vmatmul.mubr.f32.gmra.mrb[0].mxu0 %v448
    %v563 = vpop.f32.mrb[0].mxu0
    %v564 = vadd.f32 0.0, %v563
    %v565 = vpop.f32.mrb[0].mxu0
    %566 = vmatprep.mubr.f32.mxu0 0.0
    %567 = vmatmul.mubr.f32.gmra.mrb[0].mxu0 %v451
    %v568 = vpop.f32.mrb[0].mxu0
    %v569 = vadd.f32 0.0, %v568
    %v570 = vpop.f32.mrb[0].mxu0
    %571 = vmatprep.mubr.f32.mxu0 0.0
    %572 = vmatmul.mubr.f32.gmra.mrb[0].mxu0 %v454
    %v573 = vpop.f32.mrb[0].mxu0
    %v574 = vadd.f32 0.0, %v573
    %v575 = vpop.f32.mrb[0].mxu0
    %576 = vmatprep.mubr.f32.mxu0 0.0
    %577 = vmatmul.mubr.f32.gmra.mrb[0].mxu0 %v457
    %v578 = vpop.f32.mrb[0].mxu0
    %v579 = vadd.f32 0.0, %v578
    %v580 = vpop.f32.mrb[0].mxu0
    %581 = vmatprep.mubr.f32.mxu0 0.0
    %582 = vmatmul.mubr.f32.gmra.mrb[0].mxu0 %v460
    %v583 = vpop.f32.mrb[0].mxu0
    %v584 = vadd.f32 0.0, %v583
    %v585 = vpop.f32.mrb[0].mxu0
    %586 = vmatprep.mubr.f32.mxu0 0.0
    %587 = vmatmul.mubr.f32.gmra.mrb[0].mxu0 %v463
    %v588 = vpop.f32.mrb[0].mxu0
    %v589 = vadd.f32 0.0, %v588
    %v590 = vpop.f32.mrb[0].mxu0
    %591 = vmatprep.mubr.f32.mxu0 0.0
    %592 = vmatmul.mubr.f32.gmra.mrb[0].mxu0 %v466
    %v593 = vpop.f32.mrb[0].mxu0
    %v594 = vadd.f32 0.0, %v593
    %v595 = vpop.f32.mrb[0].mxu0
    %596 = vmatprep.mubr.f32.mxu0 0.0
    %597 = vmatmul.mubr.f32.gmra.mrb[0].mxu0 %v469
    %v598 = vpop.f32.mrb[0].mxu0
    %v599 = vadd.f32 0.0, %v598
    %v600 = vpop.f32.mrb[0].mxu0
    %601 = vmatprep.mubr.f32.mxu0 0.0
    %602 = vmatmul.mubr.f32.gmra.mrb[0].mxu0 %v472
    %v603 = vpop.f32.mrb[0].mxu0
    %v604 = vadd.f32 0.0, %v603
    %v605 = vpop.f32.mrb[0].mxu0
    %606 = vmatprep.mubr.f32.mxu0 0.0
    %607 = vmatmul.mubr.f32.gmra.mrb[0].mxu0 %v475
    %v608 = vpop.f32.mrb[0].mxu0
    %v609 = vadd.f32 0.0, %v608
    %v610 = vpop.f32.mrb[0].mxu0
    %611 = vmatprep.mubr.f32.mxu0 0.0
    %612 = vmatmul.mubr.f32.gmra.mrb[0].mxu0 %v478
    %v613 = vpop.f32.mrb[0].mxu0
    %v614 = vadd.f32 0.0, %v613
    %v615 = vpop.f32.mrb[0].mxu0
    %616 = vmatprep.mubr.f32.mxu0 0.0
    %617 = vmatmul.mubr.f32.gmra.mrb[0].mxu0 %v481
    %v618 = vpop.f32.mrb[0].mxu0
    %v619 = vadd.f32 0.0, %v618
    %v620 = vpop.f32.mrb[0].mxu0
    %621 = vmatprep.mubr.f32.mxu0 0.0
    %622 = vmatmul.mubr.f32.gmra.mrb[0].mxu0 %v484
    %v623 = vpop.f32.mrb[0].mxu0
    %v624 = vadd.f32 0.0, %v623
    %v625 = vpop.f32.mrb[0].mxu0
    %626 = vmatprep.mubr.f32.mxu0 0.0
    %627 = vmatmul.mubr.f32.gmra.mrb[0].mxu0 %v487
    %v628 = vpop.f32.mrb[0].mxu0
    %v629 = vadd.f32 0.0, %v628
    %v630 = vpop.f32.mrb[0].mxu0
    %631 = vmatprep.mubr.f32.mxu0 0.0
    %632 = vmatmul.mubr.f32.gmra.mrb[0].mxu0 %v490
    %v633 = vpop.f32.mrb[0].mxu0
    %v634 = vadd.f32 0.0, %v633
    %v635 = vpop.f32.mrb[0].mxu0
    %636 = vdwg.mxu0
    %637 = vst [vmem:[#allocation2 + $0x8] sm:$0xff] %v559
    %638 = vst [vmem:[#allocation2 + $0x18] sm:$0xff] %v564
    %639 = vst [vmem:[#allocation2 + $0x28] sm:$0xff] %v569
    %640 = vst [vmem:[#allocation2 + $0x38] sm:$0xff] %v574
    %641 = vst [vmem:[#allocation2 + $0x48] sm:$0xff] %v579
    %642 = vst [vmem:[#allocation2 + $0x58] sm:$0xff] %v584
    %643 = vst [vmem:[#allocation2 + $0x68] sm:$0xff] %v589
    %644 = vst [vmem:[#allocation2 + $0x78] sm:$0xff] %v594
    %645 = vst [vmem:[#allocation2 + $0x88] sm:$0xff] %v599
    %646 = vst [vmem:[#allocation2 + $0x98] sm:$0xff] %v604
    %647 = vst [vmem:[#allocation2 + $0xa8] sm:$0xff] %v609
    %648 = vst [vmem:[#allocation2 + $0xb8] sm:$0xff] %v614
    %649 = vst [vmem:[#allocation2 + $0xc8] sm:$0xff] %v619
    %650 = vst [vmem:[#allocation2 + $0xd8] sm:$0xff] %v624
    %651 = vst [vmem:[#allocation2 + $0xe8] sm:$0xff] %v629
    %652 = vst [vmem:[#allocation2 + $0xf8] sm:$0xff] %v634
    %v653 = vld [vmem:[#allocation2] sm:$0xff]
    %v654 = vld [vmem:[#allocation2 + $0x10] sm:$0xff]
    %v655 = vld [vmem:[#allocation2 + $0x20] sm:$0xff]
    %v656 = vld [vmem:[#allocation2 + $0x30] sm:$0xff]
    %v657 = vld [vmem:[#allocation2 + $0x40] sm:$0xff]
    %v658 = vld [vmem:[#allocation2 + $0x50] sm:$0xff]
    %v659 = vld [vmem:[#allocation2 + $0x60] sm:$0xff]
    %v660 = vld [vmem:[#allocation2 + $0x70] sm:$0xff]
    %v661 = vld [vmem:[#allocation2 + $0x80] sm:$0xff]
    %v662 = vld [vmem:[#allocation2 + $0x90] sm:$0xff]
    %v663 = vld [vmem:[#allocation2 + $0xa0] sm:$0xff]
    %v664 = vld [vmem:[#allocation2 + $0xb0] sm:$0xff]
    %v665 = vld [vmem:[#allocation2 + $0xc0] sm:$0xff]
    %v666 = vld [vmem:[#allocation2 + $0xd0] sm:$0xff]
    %v667 = vld [vmem:[#allocation2 + $0xe0] sm:$0xff]
    %v668 = vld [vmem:[#allocation2 + $0xf0] sm:$0xff]
    %669 = vxpose.xlu0.b32.start [1/16] %v653, 128
    %670 = vxpose.xlu0.b32.cont [2/16] %v654, 128
    %671 = vxpose.xlu0.b32.cont [3/16] %v655, 128
    %672 = vxpose.xlu0.b32.cont [4/16] %v656, 128
    %673 = vxpose.xlu0.b32.cont [5/16] %v657, 128
    %674 = vxpose.xlu0.b32.cont [6/16] %v658, 128
    %675 = vxpose.xlu0.b32.cont [7/16] %v659, 128
    %676 = vxpose.xlu0.b32.cont [8/16] %v660, 128
    %677 = vxpose.xlu0.b32.cont [9/16] %v661, 128
    %678 = vxpose.xlu0.b32.cont [10/16] %v662, 128
    %679 = vxpose.xlu0.b32.cont [11/16] %v663, 128
    %680 = vxpose.xlu0.b32.cont [12/16] %v664, 128
    %681 = vxpose.xlu0.b32.cont [13/16] %v665, 128
    %682 = vxpose.xlu0.b32.cont [14/16] %v666, 128
    %683 = vxpose.xlu0.b32.cont [15/16] %v667, 128
    %684 = vxpose.xlu0.b32.end [16/16] %v668, 128
    %v685 = vpop.trf.xlu0
    %v686 = vpop.trf.xlu0
    %v687 = vpop.trf.xlu0
    %v688 = vpop.trf.xlu0
    %v689 = vpop.trf.xlu0
    %v690 = vpop.trf.xlu0
    %v691 = vpop.trf.xlu0
    %v692 = vpop.trf.xlu0
    %v693 = vpop.trf.xlu0
    %v694 = vpop.trf.xlu0
    %v695 = vpop.trf.xlu0
    %v696 = vpop.trf.xlu0
    %v697 = vpop.trf.xlu0
    %v698 = vpop.trf.xlu0
    %v699 = vpop.trf.xlu0
    %v700 = vpop.trf.xlu0
    %701 = vst [vmem:[#allocation3] sm:$0xff] %v685
    %702 = vst [vmem:[#allocation3 + $0x8] sm:$0xff] %v686
    %703 = vst [vmem:[#allocation3 + $0x10] sm:$0xff] %v687
    %704 = vst [vmem:[#allocation3 + $0x18] sm:$0xff] %v688
    %705 = vst [vmem:[#allocation3 + $0x20] sm:$0xff] %v689
    %706 = vst [vmem:[#allocation3 + $0x28] sm:$0xff] %v690
    %707 = vst [vmem:[#allocation3 + $0x30] sm:$0xff] %v691
    %708 = vst [vmem:[#allocation3 + $0x38] sm:$0xff] %v692
    %709 = vst [vmem:[#allocation3 + $0x40] sm:$0xff] %v693
    %710 = vst [vmem:[#allocation3 + $0x48] sm:$0xff] %v694
    %711 = vst [vmem:[#allocation3 + $0x50] sm:$0xff] %v695
    %712 = vst [vmem:[#allocation3 + $0x58] sm:$0xff] %v696
    %713 = vst [vmem:[#allocation3 + $0x60] sm:$0xff] %v697
    %714 = vst [vmem:[#allocation3 + $0x68] sm:$0xff] %v698
    %715 = vst [vmem:[#allocation3 + $0x70] sm:$0xff] %v699
    %716 = vst [vmem:[#allocation3 + $0x78] sm:$0xff] %v700
    %v717 = vld [vmem:[#allocation2 + $0x8] sm:$0xff]
    %v718 = vld [vmem:[#allocation2 + $0x18] sm:$0xff]
    %v719 = vld [vmem:[#allocation2 + $0x28] sm:$0xff]
    %v720 = vld [vmem:[#allocation2 + $0x38] sm:$0xff]
    %v721 = vld [vmem:[#allocation2 + $0x48] sm:$0xff]
    %v722 = vld [vmem:[#allocation2 + $0x58] sm:$0xff]
    %v723 = vld [vmem:[#allocation2 + $0x68] sm:$0xff]
    %v724 = vld [vmem:[#allocation2 + $0x78] sm:$0xff]
    %v725 = vld [vmem:[#allocation2 + $0x88] sm:$0xff]
    %v726 = vld [vmem:[#allocation2 + $0x98] sm:$0xff]
    %v727 = vld [vmem:[#allocation2 + $0xa8] sm:$0xff]
    %v728 = vld [vmem:[#allocation2 + $0xb8] sm:$0xff]
    %v729 = vld [vmem:[#allocation2 + $0xc8] sm:$0xff]
    %v730 = vld [vmem:[#allocation2 + $0xd8] sm:$0xff]
    %v731 = vld [vmem:[#allocation2 + $0xe8] sm:$0xff]
    %v732 = vld [vmem:[#allocation2 + $0xf8] sm:$0xff]
    %733 = vxpose.xlu0.b32.start [1/16] %v717, 128
    %734 = vxpose.xlu0.b32.cont [2/16] %v718, 128
    %735 = vxpose.xlu0.b32.cont [3/16] %v719, 128
    %736 = vxpose.xlu0.b32.cont [4/16] %v720, 128
    %737 = vxpose.xlu0.b32.cont [5/16] %v721, 128
    %738 = vxpose.xlu0.b32.cont [6/16] %v722, 128
    %739 = vxpose.xlu0.b32.cont [7/16] %v723, 128
    %740 = vxpose.xlu0.b32.cont [8/16] %v724, 128
    %741 = vxpose.xlu0.b32.cont [9/16] %v725, 128
    %742 = vxpose.xlu0.b32.cont [10/16] %v726, 128
    %743 = vxpose.xlu0.b32.cont [11/16] %v727, 128
    %744 = vxpose.xlu0.b32.cont [12/16] %v728, 128
    %745 = vxpose.xlu0.b32.cont [13/16] %v729, 128
    %746 = vxpose.xlu0.b32.cont [14/16] %v730, 128
    %747 = vxpose.xlu0.b32.cont [15/16] %v731, 128
    %748 = vxpose.xlu0.b32.end [16/16] %v732, 128
    %v749 = vpop.trf.xlu0
    %v750 = vpop.trf.xlu0
    %v751 = vpop.trf.xlu0
    %v752 = vpop.trf.xlu0
    %v753 = vpop.trf.xlu0
    %v754 = vpop.trf.xlu0
    %v755 = vpop.trf.xlu0
    %v756 = vpop.trf.xlu0
    %v757 = vpop.trf.xlu0
    %v758 = vpop.trf.xlu0
    %v759 = vpop.trf.xlu0
    %v760 = vpop.trf.xlu0
    %v761 = vpop.trf.xlu0
    %v762 = vpop.trf.xlu0
    %v763 = vpop.trf.xlu0
    %v764 = vpop.trf.xlu0
    %765 = vst [vmem:[#allocation3 + $0x80] sm:$0xff] %v749
    %766 = vst [vmem:[#allocation3 + $0x88] sm:$0xff] %v750
    %767 = vst [vmem:[#allocation3 + $0x90] sm:$0xff] %v751
    %768 = vst [vmem:[#allocation3 + $0x98] sm:$0xff] %v752
    %769 = vst [vmem:[#allocation3 + $0xa0] sm:$0xff] %v753
    %770 = vst [vmem:[#allocation3 + $0xa8] sm:$0xff] %v754
    %771 = vst [vmem:[#allocation3 + $0xb0] sm:$0xff] %v755
    %772 = vst [vmem:[#allocation3 + $0xb8] sm:$0xff] %v756
    %773 = vst [vmem:[#allocation3 + $0xc0] sm:$0xff] %v757
    %774 = vst [vmem:[#allocation3 + $0xc8] sm:$0xff] %v758
    %775 = vst [vmem:[#allocation3 + $0xd0] sm:$0xff] %v759
    %776 = vst [vmem:[#allocation3 + $0xd8] sm:$0xff] %v760
    %777 = vst [vmem:[#allocation3 + $0xe0] sm:$0xff] %v761
    %778 = vst [vmem:[#allocation3 + $0xe8] sm:$0xff] %v762
    %779 = vst [vmem:[#allocation3 + $0xf0] sm:$0xff] %v763
    %780 = vst [vmem:[#allocation3 + $0xf8] sm:$0xff] %v764
    %v781 = vld [vmem:[#allocation11] sm:$0xff]
    %v782 = vld [vmem:[#allocation3] sm:$0xff]
    %v783 = vld [vmem:[#allocation3 + $0x80] sm:$0x1]
    %v784 = vmax.f32 %v783, 1e-24
    %v785 = vrsqrt.pop %v784
    %v786 = vmul.f32 %v783, %v785
    %v787 = vlaneseq
    %v788 = vshrl.u32 %v787, 7
    %v789 = vsub.s32 0, %v788
    %v790 = vrot.slane %v786, %v789
    %792 = vset.pattern.permute.xlu0 0
    %793 = vperm.xlu0 %792, %v781
    %v794 = vpop.permute.xlu0 %793
    %v796 = vadd.f32 %v790, %v794
    %v797 = vmul.f32 %v782, 2.0
    %v798 = vsub.f32 %v796, %v797
    %v799 = vmax.f32 %v798, 0.0
    %v800 = vlaneseq
    %v801 = vshrl.u32 %v800, 7
    %v802 = vsub.s32 0, %v801
    %v803 = vrot.slane %v785, %v802
    %804 = vset.pattern.permute.xlu0 1
    %805 = vperm.xlu0 %804, %v781
    %v806 = vpop.permute.xlu0 %805
    %v808 = vmul.f32 %v803, %v806
    %v809 = vmul.f32 %v782, %v808
    %v810 = vadd.f32 %v799, 0.0
    %v811 = vld [vmem:[#allocation3 + $0x8] sm:$0xff]
    %v812 = vld [vmem:[#allocation3 + $0x81] sm:$0x1]
    %v813 = vmax.f32 %v812, 1e-24
    %v814 = vrsqrt.pop %v813
    %v815 = vmul.f32 %v812, %v814
    %v816 = vlaneseq
    %v817 = vshrl.u32 %v816, 7
    %v818 = vsub.s32 0, %v817
    %v819 = vrot.slane %v815, %v818
    %v820 = vadd.f32 %v819, %v794
    %v821 = vmul.f32 %v811, 2.0
    %v822 = vsub.f32 %v820, %v821
    %v823 = vmax.f32 %v822, 0.0
    %v824 = vlaneseq
    %v825 = vshrl.u32 %v824, 7
    %v826 = vsub.s32 0, %v825
    %v827 = vrot.slane %v814, %v826
    %v828 = vmul.f32 %v827, %v806
    %v829 = vmul.f32 %v811, %v828
    %v830 = vmin.f32 %v799, %v823
    %v831 = vmax.f32 %v799, %v823
    %v832 = vadd.f32 %v810, %v823
    %v833 = vmax.f32 %v809, %v829
    %v834 = vld [vmem:[#allocation3 + $0x10] sm:$0xff]
    %v835 = vld [vmem:[#allocation3 + $0x82] sm:$0x1]
    %v836 = vmax.f32 %v835, 1e-24
    %v837 = vrsqrt.pop %v836
    %v838 = vmul.f32 %v835, %v837
    %v839 = vlaneseq
    %v840 = vshrl.u32 %v839, 7
    %v841 = vsub.s32 0, %v840
    %v842 = vrot.slane %v838, %v841
    %v843 = vadd.f32 %v842, %v794
    %v844 = vmul.f32 %v834, 2.0
    %v845 = vsub.f32 %v843, %v844
    %v846 = vmax.f32 %v845, 0.0
    %v847 = vlaneseq
    %v848 = vshrl.u32 %v847, 7
    %v849 = vsub.s32 0, %v848
    %v850 = vrot.slane %v837, %v849
    %v851 = vmul.f32 %v850, %v806
    %v852 = vmul.f32 %v834, %v851
    %v853 = vmin.f32 %v830, %v846
    %v854 = vmax.f32 %v831, %v846
    %v855 = vadd.f32 %v832, %v846
    %v856 = vmax.f32 %v833, %v852
    %v857 = vmul.f32 %v855, 0.33333334
    %v858 = vlaneseq
    %v859 = vshrl.u32 %v858, 7
    %vm860 = vcmp.lt.s32.totalorder %v859, 4
    %v861 = vsel %vm860, 1, 0
    %v862 = vcvt.s32.f32 %v861
    %v863 = vmul.f32 %v853, %v862
    %v864 = vrot.slane %v863, 4
    %v865 = vadd.f32 %v863, %v864
    %v866 = vrot.slane %v865, 2
    %v867 = vadd.f32 %v865, %v866
    %v868 = vrot.slane %v867, 1
    %v869 = vadd.f32 %v867, %v868
    %v870 = vmul.f32 %v869, 0.25
    %v871 = vsub.f32 %v853, %v870
    %v872 = vmul.f32 %v871, %v862
    %v873 = vmul.f32 %v872, %v872
    %v874 = vrot.slane %v873, 4
    %v875 = vadd.f32 %v873, %v874
    %v876 = vrot.slane %v875, 2
    %v877 = vadd.f32 %v875, %v876
    %v878 = vrot.slane %v877, 1
    %v879 = vadd.f32 %v877, %v878
    %v880 = vmul.f32 %v879, 0.25
    %v881 = vadd.f32 %v880, 1e-08
    %v882 = vrsqrt.pop %v881
    %v883 = vmul.f32 %v872, %v882
    %v884 = vmul.f32 %v854, %v862
    %v885 = vrot.slane %v884, 4
    %v886 = vadd.f32 %v884, %v885
    %v887 = vrot.slane %v886, 2
    %v888 = vadd.f32 %v886, %v887
    %v889 = vrot.slane %v888, 1
    %v890 = vadd.f32 %v888, %v889
    %v891 = vmul.f32 %v890, 0.25
    %v892 = vsub.f32 %v854, %v891
    %v893 = vmul.f32 %v892, %v862
    %v894 = vmul.f32 %v893, %v893
    %v895 = vrot.slane %v894, 4
    %v896 = vadd.f32 %v894, %v895
    %v897 = vrot.slane %v896, 2
    %v898 = vadd.f32 %v896, %v897
    %v899 = vrot.slane %v898, 1
    %v900 = vadd.f32 %v898, %v899
    %v901 = vmul.f32 %v900, 0.25
    %v902 = vadd.f32 %v901, 1e-08
    %v903 = vrsqrt.pop %v902
    %v904 = vmul.f32 %v893, %v903
    %v905 = vmul.f32 %v857, %v862
    %v906 = vrot.slane %v905, 4
    %v907 = vadd.f32 %v905, %v906
    %v908 = vrot.slane %v907, 2
    %v909 = vadd.f32 %v907, %v908
    %v910 = vrot.slane %v909, 1
    %v911 = vadd.f32 %v909, %v910
    %v912 = vmul.f32 %v911, 0.25
    %v913 = vsub.f32 %v857, %v912
    %v914 = vmul.f32 %v913, %v862
    %v915 = vmul.f32 %v914, %v914
    %v916 = vrot.slane %v915, 4
    %v917 = vadd.f32 %v915, %v916
    %v918 = vrot.slane %v917, 2
    %v919 = vadd.f32 %v917, %v918
    %v920 = vrot.slane %v919, 1
    %v921 = vadd.f32 %v919, %v920
    %v922 = vmul.f32 %v921, 0.25
    %v923 = vadd.f32 %v922, 1e-08
    %v924 = vrsqrt.pop %v923
    %v925 = vmul.f32 %v914, %v924
    %v926 = vmul.f32 %v856, %v862
    %v927 = vrot.slane %v926, 4
    %v928 = vadd.f32 %v926, %v927
    %v929 = vrot.slane %v928, 2
    %v930 = vadd.f32 %v928, %v929
    %v931 = vrot.slane %v930, 1
    %v932 = vadd.f32 %v930, %v931
    %v933 = vmul.f32 %v932, 0.25
    %v934 = vsub.f32 %v856, %v933
    %v935 = vmul.f32 %v934, %v862
    %v936 = vmul.f32 %v935, %v935
    %v937 = vrot.slane %v936, 4
    %v938 = vadd.f32 %v936, %v937
    %v939 = vrot.slane %v938, 2
    %v940 = vadd.f32 %v938, %v939
    %v941 = vrot.slane %v940, 1
    %v942 = vadd.f32 %v940, %v941
    %v943 = vmul.f32 %v942, 0.25
    %v944 = vadd.f32 %v943, 1e-08
    %v945 = vrsqrt.pop %v944
    %v946 = vmul.f32 %v935, %v945
    %v947 = vld [vmem:[#allocation13] sm:$0xff]
    %v948 = vld [vmem:[#allocation13 + $0x8] sm:$0xff]
    %v949 = vld [vmem:[#allocation13 + $0x10] sm:$0xff]
    %v950 = vld [vmem:[#allocation13 + $0x18] sm:$0xff]
    %v951 = vld [vmem:[#allocation14] sm:$0xff]
    %v952 = vld [vmem:[#allocation14 + $0x8] sm:$0xff]
    %v953 = vld [vmem:[#allocation14 + $0x10] sm:$0xff]
    %v954 = vld [vmem:[#allocation14 + $0x18] sm:$0xff]
    %956 = vset.pattern.permute.xlu0 0
    %957 = vperm.xlu0 %956, %v951
    %v958 = vpop.permute.xlu0 %957
    %961 = vset.pattern.permute.xlu0 0
    %962 = vperm.xlu0 %961, %v952
    %v963 = vpop.permute.xlu0 %962
    %966 = vset.pattern.permute.xlu0 0
    %967 = vperm.xlu0 %966, %v953
    %v968 = vpop.permute.xlu0 %967
    %971 = vset.pattern.permute.xlu0 0
    %972 = vperm.xlu0 %971, %v954
    %v973 = vpop.permute.xlu0 %972
    %vm975 = vcmask 261120
    %v977 = vsel %vm975, %v947, 0
    %v980 = vsel %vm975, %v948, 0
    %v983 = vsel %vm975, %v949, 0
    %v986 = vsel %vm975, %v950, 0
    %988 = vmatprep.subr.mxu0 0.0
    %989 = vmatpush1.msra.mxu0 %v883
    %990 = vmatprep.subr.mxu0 0.0
    %991 = vmatpush1.msra.mxu0 %v904
    %992 = vmatprep.subr.mxu0 0.0
    %993 = vmatpush1.msra.mxu0 %v925
    %994 = vmatprep.subr.mxu0 0.0
    %995 = vmatpush1.msra.mxu0 %v946
    %996 = vmatprep.subr.mxu0 0.0
    %997 = vmatpush1.msra.mxu0 0.0
    %998 = vmatprep.subr.mxu0 0.0
    %999 = vmatpush1.msra.mxu0 0.0
    %1000 = vmatprep.subr.mxu0 0.0
    %1001 = vmatpush1.msra.mxu0 0.0
    %1002 = vmatprep.subr.mxu0 0.0
    %1003 = vmatpush1.msra.mxu0 0.0
    %1004 = vmatprep.subr.mxu0 0.0
    %1005 = vmatpush1.msra.mxu0 0.0
    %1006 = vmatprep.subr.mxu0 0.0
    %1007 = vmatpush1.msra.mxu0 0.0
    %1008 = vmatprep.subr.mxu0 0.0
    %1009 = vmatpush1.msra.mxu0 0.0
    %1010 = vmatprep.subr.mxu0 0.0
    %1011 = vmatpush1.msra.mxu0 0.0
    %1012 = vmatprep.subr.mxu0 0.0
    %1013 = vmatpush1.msra.mxu0 0.0
    %1014 = vmatprep.subr.mxu0 0.0
    %1015 = vmatpush1.msra.mxu0 0.0
    %1016 = vmatprep.subr.mxu0 0.0
    %1017 = vmatpush1.msra.mxu0 0.0
    %1018 = vmatprep.subr.mxu0 0.0
    %1019 = vmatpush1.msra.mxu0 0.0
    %1020 = vmatprep.subr.mxu0 0.0
    %1021 = vmatpush1.msra.mxu0 0.0
    %1022 = vmatprep.subr.mxu0 0.0
    %1023 = vmatpush1.msra.mxu0 0.0
    %1024 = vmatprep.subr.mxu0 0.0
    %1025 = vmatpush1.msra.mxu0 0.0
    %1026 = vmatprep.subr.mxu0 0.0
    %1027 = vmatpush1.msra.mxu0 0.0
    %1028 = vmatprep.subr.mxu0 0.0
    %1029 = vmatpush1.msra.mxu0 0.0
    %1030 = vmatprep.subr.mxu0 0.0
    %1031 = vmatpush1.msra.mxu0 0.0
    %1032 = vmatprep.subr.mxu0 0.0
    %1033 = vmatpush1.msra.mxu0 0.0
    %1034 = vmatprep.subr.mxu0 0.0
    %1035 = vmatpush1.msra.mxu0 0.0
    %1036 = vmatprep.subr.mxu0 0.0
    %1037 = vmatpush1.msra.mxu0 0.0
    %1038 = vmatprep.subr.mxu0 0.0
    %1039 = vmatpush1.msra.mxu0 0.0
    %1040 = vmatprep.subr.mxu0 0.0
    %1041 = vmatpush1.msra.mxu0 0.0
    %1042 = vmatprep.subr.mxu0 0.0
    %1043 = vmatpush1.msra.mxu0 0.0
    %1044 = vmatprep.subr.mxu0 0.0
    %1045 = vmatpush1.msra.mxu0 0.0
    %1046 = vmatprep.subr.mxu0 0.0
    %1047 = vmatpush1.msra.mxu0 0.0
    %1048 = vmatprep.subr.mxu0 0.0
    %1049 = vmatpush1.msra.mxu0 0.0
    %1050 = vmatprep.subr.mxu0 0.0
    %1051 = vmatpush1.msra.mxu0 0.0
    %1052 = vmatprep.mubr.f32.mxu0 0.0
    %1053 = vmatmul.mubr.f32.gmra.mrb[0].mxu0 %v977
    %v1054 = vpop.f32.mrb[0].mxu0
    %v1055 = vadd.f32 %v958, %v1054
    %v1056 = vpop.f32.mrb[0].mxu0
    %1057 = vmatprep.mubr.f32.mxu0 0.0
    %1058 = vmatmul.mubr.f32.gmra.mrb[0].mxu0 %v980
    %v1059 = vpop.f32.mrb[0].mxu0
    %v1060 = vadd.f32 %v963, %v1059
    %v1061 = vpop.f32.mrb[0].mxu0
    %1062 = vmatprep.mubr.f32.mxu0 0.0
    %1063 = vmatmul.mubr.f32.gmra.mrb[0].mxu0 %v983
    %v1064 = vpop.f32.mrb[0].mxu0
    %v1065 = vadd.f32 %v968, %v1064
    %v1066 = vpop.f32.mrb[0].mxu0
    %1067 = vmatprep.mubr.f32.mxu0 0.0
    %1068 = vmatmul.mubr.f32.gmra.mrb[0].mxu0 %v986
    %v1069 = vpop.f32.mrb[0].mxu0
    %v1070 = vadd.f32 %v973, %v1069
    %v1071 = vpop.f32.mrb[0].mxu0
    %1072 = vdwg.mxu0
    %vm1073 = vcmp.gt.f32.partialorder %v1055, 0.0
    %vm1074 = vcmp.gt.f32.partialorder %v1060, 0.0
    %vm1075 = vcmp.gt.f32.partialorder %v1065, 0.0
    %vm1076 = vcmp.gt.f32.partialorder %v1070, 0.0
    %v1077 = vmul.f32 %v1055, 1.442695
    %v1078 = vpow.pop %v1077
    %v1079 = vmul.f32 %v1060, 1.442695
    %v1080 = vpow.pop %v1079
    %v1081 = vmul.f32 %v1065, 1.442695
    %v1082 = vpow.pop %v1081
    %v1083 = vmul.f32 %v1070, 1.442695
    %v1084 = vpow.pop %v1083
    %v1085 = vsub.f32 %v1078, 1.0
    %v1086 = vsub.f32 %v1080, 1.0
    %v1087 = vsub.f32 %v1082, 1.0
    %v1088 = vsub.f32 %v1084, 1.0
    %v1089 = vmul.f32 %v1085, 1.6732632
    %v1090 = vmul.f32 %v1086, 1.6732632
    %v1091 = vmul.f32 %v1087, 1.6732632
    %v1092 = vmul.f32 %v1088, 1.6732632
    %v1093 = vsel %vm1073, %v1055, %v1089
    %v1094 = vsel %vm1074, %v1060, %v1090
    %v1095 = vsel %vm1075, %v1065, %v1091
    %v1096 = vsel %vm1076, %v1070, %v1092
    %v1097 = vmul.f32 %v1093, 1.050701
    %v1098 = vmul.f32 %v1094, 1.050701
    %v1099 = vmul.f32 %v1095, 1.050701
    %v1100 = vmul.f32 %v1096, 1.050701
    %v1101 = vld [vmem:[#allocation16] sm:$0xff]
    %v1102 = vld [vmem:[#allocation16 + $0x8] sm:$0xff]
    %v1103 = vld [vmem:[#allocation16 + $0x10] sm:$0xff]
    %v1104 = vld [vmem:[#allocation16 + $0x18] sm:$0xff]
    %v1105 = vld [vmem:[#allocation17] sm:$0xff]
    %v1106 = vld [vmem:[#allocation17 + $0x8] sm:$0xff]
    %v1107 = vld [vmem:[#allocation17 + $0x10] sm:$0xff]
    %v1108 = vld [vmem:[#allocation17 + $0x18] sm:$0xff]
    %1110 = vset.pattern.permute.xlu0 0
    %1111 = vperm.xlu0 %1110, %v1105
    %v1112 = vpop.permute.xlu0 %1111
    %1115 = vset.pattern.permute.xlu0 0
    %1116 = vperm.xlu0 %1115, %v1106
    %v1117 = vpop.permute.xlu0 %1116
    %1120 = vset.pattern.permute.xlu0 0
    %1121 = vperm.xlu0 %1120, %v1107
    %v1122 = vpop.permute.xlu0 %1121
    %1125 = vset.pattern.permute.xlu0 0
    %1126 = vperm.xlu0 %1125, %v1108
    %v1127 = vpop.permute.xlu0 %1126
    %v1130 = vsel %vm975, %v1101, 0
    %v1133 = vsel %vm975, %v1102, 0
    %v1136 = vsel %vm975, %v1103, 0
    %v1139 = vsel %vm975, %v1104, 0
    %1141 = vmatprep.subr.mxu0 0.0
    %1142 = vmatpush1.msra.mxu0 %v1097
    %1143 = vmatprep.subr.mxu0 0.0
    %1144 = vmatpush1.msra.mxu0 %v1098
    %1145 = vmatprep.subr.mxu0 0.0
    %1146 = vmatpush1.msra.mxu0 %v1099
    %1147 = vmatprep.subr.mxu0 0.0
    %1148 = vmatpush1.msra.mxu0 %v1100
    %1149 = vmatprep.subr.mxu0 0.0
    %1150 = vmatpush1.msra.mxu0 0.0
    %1151 = vmatprep.subr.mxu0 0.0
    %1152 = vmatpush1.msra.mxu0 0.0
    %1153 = vmatprep.subr.mxu0 0.0
    %1154 = vmatpush1.msra.mxu0 0.0
    %1155 = vmatprep.subr.mxu0 0.0
    %1156 = vmatpush1.msra.mxu0 0.0
    %1157 = vmatprep.subr.mxu0 0.0
    %1158 = vmatpush1.msra.mxu0 0.0
    %1159 = vmatprep.subr.mxu0 0.0
    %1160 = vmatpush1.msra.mxu0 0.0
    %1161 = vmatprep.subr.mxu0 0.0
    %1162 = vmatpush1.msra.mxu0 0.0
    %1163 = vmatprep.subr.mxu0 0.0
    %1164 = vmatpush1.msra.mxu0 0.0
    %1165 = vmatprep.subr.mxu0 0.0
    %1166 = vmatpush1.msra.mxu0 0.0
    %1167 = vmatprep.subr.mxu0 0.0
    %1168 = vmatpush1.msra.mxu0 0.0
    %1169 = vmatprep.subr.mxu0 0.0
    %1170 = vmatpush1.msra.mxu0 0.0
    %1171 = vmatprep.subr.mxu0 0.0
    %1172 = vmatpush1.msra.mxu0 0.0
    %1173 = vmatprep.subr.mxu0 0.0
    %1174 = vmatpush1.msra.mxu0 0.0
    %1175 = vmatprep.subr.mxu0 0.0
    %1176 = vmatpush1.msra.mxu0 0.0
    %1177 = vmatprep.subr.mxu0 0.0
    %1178 = vmatpush1.msra.mxu0 0.0
    %1179 = vmatprep.subr.mxu0 0.0
    %1180 = vmatpush1.msra.mxu0 0.0
    %1181 = vmatprep.subr.mxu0 0.0
    %1182 = vmatpush1.msra.mxu0 0.0
    %1183 = vmatprep.subr.mxu0 0.0
    %1184 = vmatpush1.msra.mxu0 0.0
    %1185 = vmatprep.subr.mxu0 0.0
    %1186 = vmatpush1.msra.mxu0 0.0
    %1187 = vmatprep.subr.mxu0 0.0
    %1188 = vmatpush1.msra.mxu0 0.0
    %1189 = vmatprep.subr.mxu0 0.0
    %1190 = vmatpush1.msra.mxu0 0.0
    %1191 = vmatprep.subr.mxu0 0.0
    %1192 = vmatpush1.msra.mxu0 0.0
    %1193 = vmatprep.subr.mxu0 0.0
    %1194 = vmatpush1.msra.mxu0 0.0
    %1195 = vmatprep.subr.mxu0 0.0
    %1196 = vmatpush1.msra.mxu0 0.0
    %1197 = vmatprep.subr.mxu0 0.0
    %1198 = vmatpush1.msra.mxu0 0.0
    %1199 = vmatprep.subr.mxu0 0.0
    %1200 = vmatpush1.msra.mxu0 0.0
    %1201 = vmatprep.subr.mxu0 0.0
    %1202 = vmatpush1.msra.mxu0 0.0
    %1203 = vmatprep.subr.mxu0 0.0
    %1204 = vmatpush1.msra.mxu0 0.0
    %1205 = vmatprep.mubr.f32.mxu0 0.0
    %1206 = vmatmul.mubr.f32.gmra.mrb[0].mxu0 %v1130
    %v1207 = vpop.f32.mrb[0].mxu0
    %v1208 = vadd.f32 %v1112, %v1207
    %v1209 = vpop.f32.mrb[0].mxu0
    %1210 = vmatprep.mubr.f32.mxu0 0.0
    %1211 = vmatmul.mubr.f32.gmra.mrb[0].mxu0 %v1133
    %v1212 = vpop.f32.mrb[0].mxu0
    %v1213 = vadd.f32 %v1117, %v1212
    %v1214 = vpop.f32.mrb[0].mxu0
    %1215 = vmatprep.mubr.f32.mxu0 0.0
    %1216 = vmatmul.mubr.f32.gmra.mrb[0].mxu0 %v1136
    %v1217 = vpop.f32.mrb[0].mxu0
    %v1218 = vadd.f32 %v1122, %v1217
    %v1219 = vpop.f32.mrb[0].mxu0
    %1220 = vmatprep.mubr.f32.mxu0 0.0
    %1221 = vmatmul.mubr.f32.gmra.mrb[0].mxu0 %v1139
    %v1222 = vpop.f32.mrb[0].mxu0
    %v1223 = vadd.f32 %v1127, %v1222
    %v1224 = vpop.f32.mrb[0].mxu0
    %1225 = vdwg.mxu0
    %vm1226 = vcmp.gt.f32.partialorder %v1208, 0.0
    %vm1227 = vcmp.gt.f32.partialorder %v1213, 0.0
    %vm1228 = vcmp.gt.f32.partialorder %v1218, 0.0
    %vm1229 = vcmp.gt.f32.partialorder %v1223, 0.0
    %v1230 = vmul.f32 %v1208, 1.442695
    %v1231 = vpow.pop %v1230
    %v1232 = vmul.f32 %v1213, 1.442695
    %v1233 = vpow.pop %v1232
    %v1234 = vmul.f32 %v1218, 1.442695
    %v1235 = vpow.pop %v1234
    %v1236 = vmul.f32 %v1223, 1.442695
    %v1237 = vpow.pop %v1236
    %v1238 = vsub.f32 %v1231, 1.0
    %v1239 = vsub.f32 %v1233, 1.0
    %v1240 = vsub.f32 %v1235, 1.0
    %v1241 = vsub.f32 %v1237, 1.0
    %v1242 = vmul.f32 %v1238, 1.6732632
    %v1243 = vmul.f32 %v1239, 1.6732632
    %v1244 = vmul.f32 %v1240, 1.6732632
    %v1245 = vmul.f32 %v1241, 1.6732632
    %v1246 = vsel %vm1226, %v1208, %v1242
    %v1247 = vsel %vm1227, %v1213, %v1243
    %v1248 = vsel %vm1228, %v1218, %v1244
    %v1249 = vsel %vm1229, %v1223, %v1245
    %v1250 = vmul.f32 %v1246, 1.050701
    %v1251 = vmul.f32 %v1247, 1.050701
    %v1252 = vmul.f32 %v1248, 1.050701
    %v1253 = vmul.f32 %v1249, 1.050701
    %v1254 = vld [vmem:[#allocation19] sm:$0x7]
    %v1255 = vld [vmem:[#allocation20] sm:$0x7]
    %1257 = vset.pattern.permute.xlu0 0
    %1258 = vperm.xlu0 %1257, %v1255
    %v1259 = vpop.permute.xlu0 %1258
    %v1262 = vsel %vm975, %v1254, 0
    %1264 = vmatprep.subr.mxu0 0.0
    %1265 = vmatpush1.msra.mxu0 %v1250
    %1266 = vmatprep.subr.mxu0 0.0
    %1267 = vmatpush1.msra.mxu0 %v1251
    %1268 = vmatprep.subr.mxu0 0.0
    %1269 = vmatpush1.msra.mxu0 %v1252
    %1270 = vmatprep.subr.mxu0 0.0
    %1271 = vmatpush1.msra.mxu0 %v1253
    %1272 = vmatprep.subr.mxu0 0.0
    %1273 = vmatpush1.msra.mxu0 0.0
    %1274 = vmatprep.subr.mxu0 0.0
    %1275 = vmatpush1.msra.mxu0 0.0
    %1276 = vmatprep.subr.mxu0 0.0
    %1277 = vmatpush1.msra.mxu0 0.0
    %1278 = vmatprep.subr.mxu0 0.0
    %1279 = vmatpush1.msra.mxu0 0.0
    %1280 = vmatprep.subr.mxu0 0.0
    %1281 = vmatpush1.msra.mxu0 0.0
    %1282 = vmatprep.subr.mxu0 0.0
    %1283 = vmatpush1.msra.mxu0 0.0
    %1284 = vmatprep.subr.mxu0 0.0
    %1285 = vmatpush1.msra.mxu0 0.0
    %1286 = vmatprep.subr.mxu0 0.0
    %1287 = vmatpush1.msra.mxu0 0.0
    %1288 = vmatprep.subr.mxu0 0.0
    %1289 = vmatpush1.msra.mxu0 0.0
    %1290 = vmatprep.subr.mxu0 0.0
    %1291 = vmatpush1.msra.mxu0 0.0
    %1292 = vmatprep.subr.mxu0 0.0
    %1293 = vmatpush1.msra.mxu0 0.0
    %1294 = vmatprep.subr.mxu0 0.0
    %1295 = vmatpush1.msra.mxu0 0.0
    %1296 = vmatprep.subr.mxu0 0.0
    %1297 = vmatpush1.msra.mxu0 0.0
    %1298 = vmatprep.subr.mxu0 0.0
    %1299 = vmatpush1.msra.mxu0 0.0
    %1300 = vmatprep.subr.mxu0 0.0
    %1301 = vmatpush1.msra.mxu0 0.0
    %1302 = vmatprep.subr.mxu0 0.0
    %1303 = vmatpush1.msra.mxu0 0.0
    %1304 = vmatprep.subr.mxu0 0.0
    %1305 = vmatpush1.msra.mxu0 0.0
    %1306 = vmatprep.subr.mxu0 0.0
    %1307 = vmatpush1.msra.mxu0 0.0
    %1308 = vmatprep.subr.mxu0 0.0
    %1309 = vmatpush1.msra.mxu0 0.0
    %1310 = vmatprep.subr.mxu0 0.0
    %1311 = vmatpush1.msra.mxu0 0.0
    %1312 = vmatprep.subr.mxu0 0.0
    %1313 = vmatpush1.msra.mxu0 0.0
    %1314 = vmatprep.subr.mxu0 0.0
    %1315 = vmatpush1.msra.mxu0 0.0
    %1316 = vmatprep.subr.mxu0 0.0
    %1317 = vmatpush1.msra.mxu0 0.0
    %1318 = vmatprep.subr.mxu0 0.0
    %1319 = vmatpush1.msra.mxu0 0.0
    %1320 = vmatprep.subr.mxu0 0.0
    %1321 = vmatpush1.msra.mxu0 0.0
    %1322 = vmatprep.subr.mxu0 0.0
    %1323 = vmatpush1.msra.mxu0 0.0
    %1324 = vmatprep.subr.mxu0 0.0
    %1325 = vmatpush1.msra.mxu0 0.0
    %1326 = vmatprep.subr.mxu0 0.0
    %1327 = vmatpush1.msra.mxu0 0.0
    %1328 = vmatprep.mubr.f32.mxu0 0.0
    %1329 = vmatmul.mubr.f32.gmra.mrb[0].mxu0 %v1262
    %v1330 = vpop.f32.mrb[0].mxu0
    %v1331 = vadd.f32 %v1259, %v1330
    %v1332 = vpop.f32.mrb[0].mxu0
    %1333 = vdwg.mxu0
    %1334 = vst [vmem:[#allocation22] sm:$0x7] %v1331
    // Predicated region
    $region82: #{tpu_custom_call.1} parent=1 // pred_check
      _
    $region83: #{tpu_custom_call.1} parent=1 // pred_check_branch
      %1336 = sbr.rel (0) target = $region85
    $region84: #{tpu_custom_call.1} parent=1 // pred_region
      %s1338 = ssub.s32 64, 64
      %1339 = vsyncadd [#allocation7], %s1338
      %s1341 = sshll.u32 [#allocation22], 4
      %s1342 = int_to_ptr.vmem [resolvable:$true] %s1341
      %1344 = dma.vmem_to_hbm [thread:$0]  %s1342, 64, %s10, [#allocation7]
    $region85: #{tpu_custom_call.1} parent=1 // pred_fallthru
      _
    // Predicated region
    $region86: #{tpu_custom_call.1} parent=1 // pred_check
      _
    $region87: #{tpu_custom_call.1} parent=1 // pred_check_branch
      %1346 = sbr.rel (0) target = $region89
    $region88: #{tpu_custom_call.1} parent=1 // pred_region
      %1347 = dma.done [#allocation7], 64
    $region89: #{tpu_custom_call.1} parent=1 // pred_fallthru
      _
    %1348 = vsyncpa [#allocation6], 1
    %1349 = vsyncpa [#allocation9], 1
    %1350 = vsyncpa [#allocation12], 1
    %1351 = vsyncpa [#allocation15], 1
    %1352 = vsyncpa [#allocation18], 1
    %1353 = vsyncpa [#allocation21], 1
    %1354 = vsyncpa [#allocation7], 1

</llo_original>
